<compile_context>
chip_gen: v6e
topology: v6e:2x2x1
jax: 0.10.0
libtpu: 0.0.40
codegen_flags: <defaults>
</compile_context>

<pallas_src>
import functools

import jax
import jax.numpy as jnp
from jax.experimental import pallas as pl
from jax.experimental.pallas import tpu as pltpu

EPS = 1e-5                  # nn.BatchNorm2d default eps
LANE = 128                  # TPU lane width
SUB = 8                     # TPU sublane width
TM_TARGET = 1024            # rows per M-tile (amortizes per-step overhead)
VMEM_LIMIT = 48 * 1024 * 1024   # <= v7x 64 MiB physical, generous on v5e/v6e
MATMUL_DTYPE = jnp.bfloat16     # MXU inputs + HBM intermediates (f32 accum/stats)
NEG_PAD = -1e30             # spatial pad of pre-BN activations: relu(x*s+b) -> 0

# CNNConfig defaults
INPUT_CHANNELS = 3
HIDDEN_CHANNELS = [32, 64, 96]
KERNEL_SIZES = [4, 4, 4]
STRIDES = [2, 2, 2]
PADDINGS = [1, 1, 1]
FC_OUT = 8


def _round_up(x, m):
    return (x + m - 1) // m * m


def _choose_tm(m):
    """M-tile size: big tiles, but >=2 blocks when possible (v7x megacore)."""
    m8 = _round_up(m, SUB)
    tm = min(TM_TARGET, m8)
    if tm == m8 and m > SUB:          # would be a single block -> split in two
        tm = _round_up((m + 1) // 2, SUB)
    return tm


# -----------------------------------------------------------------------------
# Pallas kernels
# -----------------------------------------------------------------------------

def _conv_fused_kernel(p_ref, scale_k_ref, shift_k_ref, w_ref, b_ref,
                       y_ref, sum_ref, m2_ref, *, tm, m_real, m_pad, pre_act):
    """One M-tile of a conv layer expressed as an im2col matmul.

    pre_act=True folds the PREVIOUS layer's BatchNorm+ReLU into this matmul:
    the patch tile holds pre-BN activations which are normalized per patch
    column (per-channel scale/shift tiled k*k times along K, f32) before the
    bf16 MXU dot.  Also emits per-tile BN statistics for THIS layer in f32:
    sum and sum of squared deviations from the tile mean (Welford-style).

    p_ref: [TM, Kp] bf16   scale_k/shift_k: [1, Kp] f32 (resident)
    w_ref: [Kp, OCp] bf16 (resident)        b_ref: [1, OCp] f32 (resident)
    y_ref: [TM, OCp] bf16 (pre-BN output of this layer)
    sum_ref / m2_ref: [1, 1, OCp] f32
    """
    p = p_ref[...]
    if pre_act:
        pn = jnp.maximum(
            p.astype(jnp.float32) * scale_k_ref[...] + shift_k_ref[...], 0.0)
        p = pn.astype(p_ref.dtype)
    y = jnp.dot(p, w_ref[...], preferred_element_type=jnp.float32) + b_ref[...]
    y_ref[...] = y.astype(y_ref.dtype)

    if m_pad != m_real:
        # Mask rows coming from M-padding so they don't pollute BN stats.
        i = pl.program_id(0)
        cnt = jnp.maximum(jnp.minimum(m_real - i * tm, tm), 1)
        row = jax.lax.broadcasted_iota(jnp.int32, (tm, 1), 0)
        mask = row < cnt
        cnt_f = cnt.astype(jnp.float32)
        ysum = jnp.sum(jnp.where(mask, y, 0.0), axis=0, keepdims=True)
        dev = jnp.where(mask, y - ysum / cnt_f, 0.0)
    else:
        ysum = jnp.sum(y, axis=0, keepdims=True)
        dev = y - ysum * (1.0 / tm)
    sum_ref[...] = ysum[None]
    m2_ref[...] = jnp.sum(dev * dev, axis=0, keepdims=True)[None]


def _bn_relu_pool_fc_kernel(y_ref, scale_ref, shift_ref, w_ref, b_ref, o_ref):
    """Last layer finalize: normalize+ReLU, mean over spatial, FC head.

    y_ref: [TN, S, OCp] bf16, scale/shift: [1, OCp] f32,
    w_ref: [OCp, FCp] f32, b_ref: [1, FCp] f32, o_ref: [TN, FCp] f32
    """
    yn = jnp.maximum(
        y_ref[...].astype(jnp.float32) * scale_ref[...] + shift_ref[...], 0.0)
    pooled = jnp.mean(yn, axis=1)                   # AdaptiveAvgPool2d((1,1))
    o_ref[...] = jnp.dot(pooled, w_ref[...],
                         preferred_element_type=jnp.float32) + b_ref[...]


# -----------------------------------------------------------------------------
# pallas_call wrappers
# -----------------------------------------------------------------------------

def conv_fused(patches, scale_k, shift_k, w2d, b2d, *, m_real, tm, pre_act):
    Mp, Kp = patches.shape
    OCp = w2d.shape[1]
    grid_m = Mp // tm
    kernel = functools.partial(_conv_fused_kernel, tm=tm, m_real=m_real,
                               m_pad=Mp, pre_act=pre_act)
    return pl.pallas_call(
        kernel,
        out_shape=(jax.ShapeDtypeStruct((Mp, OCp), MATMUL_DTYPE),
                   jax.ShapeDtypeStruct((grid_m, 1, OCp), jnp.float32),
                   jax.ShapeDtypeStruct((grid_m, 1, OCp), jnp.float32)),
        grid_spec=pltpu.PrefetchScalarGridSpec(
            num_scalar_prefetch=0,
            grid=(grid_m,),
            in_specs=[pl.BlockSpec((tm, Kp), lambda i: (i, 0)),
                      pl.BlockSpec((1, Kp), lambda i: (0, 0)),     # resident
                      pl.BlockSpec((1, Kp), lambda i: (0, 0)),     # resident
                      pl.BlockSpec((Kp, OCp), lambda i: (0, 0)),   # resident
                      pl.BlockSpec((1, OCp), lambda i: (0, 0))],   # resident
            out_specs=(pl.BlockSpec((tm, OCp), lambda i: (i, 0)),
                       pl.BlockSpec((1, 1, OCp), lambda i: (i, 0, 0)),
                       pl.BlockSpec((1, 1, OCp), lambda i: (i, 0, 0)))),
        compiler_params=pltpu.CompilerParams(
            dimension_semantics=("parallel",),
            vmem_limit_bytes=VMEM_LIMIT),
    )(patches, scale_k, shift_k, w2d, b2d)


def bn_relu_pool_fc(y_nsc, scale2d, shift2d, wfc, bfc):
    Np, S, OCp = y_nsc.shape
    FCp = wfc.shape[1]
    TN = SUB                      # caller pads N to a multiple of 8
    grid_n = Np // TN
    return pl.pallas_call(
        _bn_relu_pool_fc_kernel,
        out_shape=jax.ShapeDtypeStruct((Np, FCp), jnp.float32),
        grid_spec=pltpu.PrefetchScalarGridSpec(
            num_scalar_prefetch=0,
            grid=(grid_n,),
            in_specs=[pl.BlockSpec((TN, S, OCp), lambda i: (i, 0, 0)),
                      pl.BlockSpec((1, OCp), lambda i: (0, 0)),
                      pl.BlockSpec((1, OCp), lambda i: (0, 0)),
                      pl.BlockSpec((OCp, FCp), lambda i: (0, 0)),
                      pl.BlockSpec((1, FCp), lambda i: (0, 0))],
            out_specs=pl.BlockSpec((TN, FCp), lambda i: (i, 0))),
        compiler_params=pltpu.CompilerParams(
            dimension_semantics=("parallel",),
            vmem_limit_bytes=VMEM_LIMIT),
    )(y_nsc, scale2d, shift2d, wfc, bfc)


# -----------------------------------------------------------------------------
# Glue: NHWC im2col (XLA gather), stats merge, parameter init, forward
# -----------------------------------------------------------------------------

def im2col_nhwc(x, k, s, p, pad_value=0.0):
    """x: [N, H, W, C] -> patches [N*OH*OW, k*k*C] in (kh, kw, C) order."""
    # TODO(synk): form the (TM, Kp) patch tile in-VMEM from the raw NHWC rows
    # (per-tap [TM,Cin]x[Cin,OCp] accumulation) for layers with Cin>=32 to
    # avoid the ~4x im2col HBM expansion; for now the gather stays an XLA
    # fusion (bf16 patches already halve its bytes).
    N, H, W, C = x.shape
    xp = jnp.pad(x, ((0, 0), (p, p), (p, p), (0, 0)), constant_values=pad_value)
    OH = (H + 2 * p - k) // s + 1
    OW = (W + 2 * p - k) // s + 1
    taps = []
    for i in range(k):
        row = []
        for j in range(k):
            row.append(xp[:, i:i + s * OH:s, j:j + s * OW:s, :])  # [N,OH,OW,C]
        taps.append(jnp.stack(row, axis=3))                       # [N,OH,OW,kj,C]
    patches = jnp.stack(taps, axis=3)                             # [N,OH,OW,ki,kj,C]
    return patches.reshape(N * OH * OW, k * k * C), OH, OW


def combine_stats(ssum, sm2, m_real, tm):
    """Chan/Welford merge of per-tile (sum, M2) -> global (mean, biased var)."""
    grid_m = ssum.shape[0]
    cnts = jnp.clip(m_real - tm * jnp.arange(grid_m), 1, tm).astype(jnp.float32)
    sums = ssum[:, 0, :]                                  # [grid_m, OCp]
    m2s = sm2[:, 0, :]
    mean_t = sums / cnts[:, None]
    grand_mean = jnp.sum(sums, axis=0) / float(m_real)
    m2 = (jnp.sum(m2s, axis=0)
          + jnp.sum(cnts[:, None] * (mean_t - grand_mean) ** 2, axis=0))
    var = jnp.maximum(m2 / float(m_real), 0.0)
    return grand_mean, var


def init_params(key):
    params = {"conv": []}
    in_c = INPUT_CHANNELS
    for out_c, k in zip(HIDDEN_CHANNELS, KERNEL_SIZES):
        key, kw, kb = jax.random.split(key, 3)
        fan_in = in_c * k * k
        # kaiming_normal_(nonlinearity='relu'): std = sqrt(2 / fan_in)
        w = jax.random.normal(kw, (out_c, in_c, k, k), jnp.float32) * jnp.sqrt(
            2.0 / fan_in)
        # Conv2d bias keeps its default uniform(-1/sqrt(fan_in), +) init.
        bound = 1.0 / jnp.sqrt(float(fan_in))
        b = jax.random.uniform(kb, (out_c,), jnp.float32, -bound, bound)
        params["conv"].append((w, b))
        in_c = out_c
    # _initialize_weights ends with nn.init.zeros_ on fc weight and bias.
    params["fc_w"] = jnp.zeros((FC_OUT, HIDDEN_CHANNELS[-1]), jnp.float32)
    params["fc_b"] = jnp.zeros((FC_OUT,), jnp.float32)
    return params


def cnn_forward(params, x_nchw):
    """x_nchw: [N, 3, H, W] float32 -> [N, 8] float32."""
    x = jnp.transpose(x_nchw, (0, 2, 3, 1)).astype(jnp.float32)  # one-time NHWC
    N = x.shape[0]
    n_layers = len(params["conv"])
    prev_scale = None          # BN fold of layer L-1 is applied inside layer L
    prev_shift = None

    for li, ((w, b), k, s, p) in enumerate(
            zip(params["conv"], KERNEL_SIZES, STRIDES, PADDINGS)):
        OC, Cin = w.shape[0], w.shape[1]
        pre_act = prev_scale is not None
        pad_val = NEG_PAD if pre_act else 0.0      # pre-BN pad must relu to 0
        patches, OH, OW = im2col_nhwc(x, k, s, p, pad_value=pad_val)
        M, K = patches.shape
        Kp = _round_up(K, LANE)                    # pad K (layer 1: 48->128)
        OCp = _round_up(OC, LANE)                  # lane-dense output
        TM = _choose_tm(M)
        grid_m = -(-M // TM)
        Mp = grid_m * TM

        if (Mp, Kp) != (M, K):
            patches = jnp.pad(patches, ((0, Mp - M), (0, Kp - K)))
        patches = patches.astype(MATMUL_DTYPE)

        if pre_act:
            # Previous layer's per-channel scale/shift tiled over the k*k taps,
            # matching the (kh, kw, C) patch-column order; K-padding gets 0.
            sk = jnp.pad(jnp.tile(prev_scale[:Cin], k * k),
                         (0, Kp - K)).reshape(1, Kp)
            hk = jnp.pad(jnp.tile(prev_shift[:Cin], k * k),
                         (0, Kp - K)).reshape(1, Kp)
        else:
            sk = jnp.zeros((1, Kp), jnp.float32)
            hk = jnp.zeros((1, Kp), jnp.float32)

        # (kh, kw, Cin, OC) flattening matches the NHWC patch column order.
        w2d = jnp.transpose(w, (2, 3, 1, 0)).reshape(K, OC)
        w2d = jnp.pad(w2d, ((0, Kp - K), (0, OCp - OC))).astype(MATMUL_DTYPE)
        b2d = jnp.pad(b, (0, OCp - OC)).reshape(1, OCp).astype(jnp.float32)

        # One pallas_call per layer: (prev BN+ReLU fold) + matmul + bias
        # + streaming Welford BN statistics of this layer.
        y_p, ssum, sm2 = conv_fused(patches, sk, hk, w2d, b2d,
                                    m_real=M, tm=TM, pre_act=pre_act)

        # Tiny [OCp] merge in XLA (training-mode biased variance, gamma=1, beta=0).
        mean, var = combine_stats(ssum, sm2, M, TM)
        scale = jax.lax.rsqrt(var + EPS)
        shift = -mean * scale

        if li < n_layers - 1:
            # Stay pre-BN / NHWC; BN+ReLU are folded into the next layer.
            x = y_p[:M, :OC].reshape(N, OH, OW, OC)
            prev_scale, prev_shift = scale, shift
        else:
            # Last layer: fuse normalize + ReLU + adaptive-avg-pool + FC.
            S = OH * OW
            y_nsc = y_p[:M].reshape(N, S, OCp)
            Np = _round_up(N, SUB)
            if Np != N:
                y_nsc = jnp.pad(y_nsc, ((0, Np - N), (0, 0), (0, 0)))
            FCp = _round_up(FC_OUT, LANE)
            wfc = jnp.pad(params["fc_w"].T,
                          ((0, OCp - OC), (0, FCp - FC_OUT)))
            bfc = jnp.pad(params["fc_b"], (0, FCp - FC_OUT)).reshape(1, FCp)
            out_p = bn_relu_pool_fc(y_nsc, scale.reshape(1, OCp),
                                    shift.reshape(1, OCp), wfc, bfc)
            return out_p[:N, :FC_OUT]


# -----------------------------------------------------------------------------
# Pure-JAX reference (for a self-check with a non-zero FC head)
# -----------------------------------------------------------------------------

def cnn_reference(params, x_nchw):
    x = x_nchw
    for (w, b), k, s, p in zip(params["conv"], KERNEL_SIZES, STRIDES, PADDINGS):
        y = jax.lax.conv_general_dilated(
            x, w, window_strides=(s, s), padding=[(p, p), (p, p)],
            dimension_numbers=("NCHW", "OIHW", "NCHW"),
            precision=jax.lax.Precision.HIGHEST)
        y = y + b.reshape(1, -1, 1, 1)
        mean = jnp.mean(y, axis=(0, 2, 3), keepdims=True)
        var = jnp.mean((y - mean) ** 2, axis=(0, 2, 3), keepdims=True)
        y = (y - mean) * jax.lax.rsqrt(var + EPS)
        x = jnp.maximum(y, 0.0)
    pooled = jnp.mean(x, axis=(2, 3))
    return jnp.dot(pooled, params["fc_w"].T,
                   precision=jax.lax.Precision.HIGHEST) + params["fc_b"]


# -----------------------------------------------------------------------------

if __name__ == "__main__":
    key = jax.random.PRNGKey(0)
    key, kp, kx, kfw, kfb = jax.random.split(key, 5)
    params = init_params(kp)
    x = jax.random.normal(kx, (2, 3, 16, 16), jnp.float32)   # NCHW, like PyTorch

    # Sanity check of the conv/BN/pool path with a non-zero FC head
    # (the module's real FC is zero-initialized, so its output is all zeros).
    # Tolerance is 2e-2 because the Pallas path runs the conv matmuls with
    # bf16 inputs (f32 accumulation/BN math) vs the f32 HIGHEST reference.
    chk = dict(params)
    chk["fc_w"] = jax.random.normal(kfw, (FC_OUT, HIDDEN_CHANNELS[-1]),
                                    jnp.float32) * 0.1
    chk["fc_b"] = jax.random.normal(kfb, (FC_OUT,), jnp.float32) * 0.1
    got = jax.block_until_ready(jax.jit(cnn_forward)(chk, x))
    want = jax.block_until_ready(cnn_reference(chk, x))
    assert jnp.allclose(got, want, atol=2e-2, rtol=2e-2), (got, want)

    out = jax.jit(cnn_forward)(params, x)
    out = jax.block_until_ready(out)
    assert out.shape == (2, 8) and out.dtype == jnp.float32
    assert bool(jnp.all(jnp.isfinite(out)))
    print("KERNEL_OK")
</pallas_src>

<mosaic_0001>
module attributes {stable_mosaic.version = 11 : i64} {
  func.func @_conv_fused_kernel(%arg0: i32, %arg1: memref<64x128xbf16, #tpu.memory_space<vmem>>, %arg2: memref<1x128xf32, #tpu.memory_space<vmem>>, %arg3: memref<1x128xf32, #tpu.memory_space<vmem>>, %arg4: memref<128x128xbf16, #tpu.memory_space<vmem>>, %arg5: memref<1x128xf32, #tpu.memory_space<vmem>>, %arg6: memref<64x128xbf16, #tpu.memory_space<vmem>>, %arg7: memref<1x1x128xf32, #tpu.memory_space<vmem>>, %arg8: memref<1x1x128xf32, #tpu.memory_space<vmem>>) attributes {dimension_semantics = [#tpu.dimension_semantics<parallel>], iteration_bounds = array<i64: 2>, scalar_prefetch = 0 : i64, scratch_operands = 0 : i64, tpu.core_type = #tpu.core_type<tc>, window_params = [{transform_indices = @transform_0, window_bounds = array<i64: 64, 128>}, {pipeline_mode = #tpu.pipeline_mode<synchronous>, transform_indices = @transform_1, window_bounds = array<i64: 1, 128>}, {pipeline_mode = #tpu.pipeline_mode<synchronous>, transform_indices = @transform_2, window_bounds = array<i64: 1, 128>}, {pipeline_mode = #tpu.pipeline_mode<synchronous>, transform_indices = @transform_3, window_bounds = array<i64: 128, 128>}, {pipeline_mode = #tpu.pipeline_mode<synchronous>, transform_indices = @transform_4, window_bounds = array<i64: 1, 128>}, {transform_indices = @transform_5, window_bounds = array<i64: 64, 128>}, {transform_indices = @transform_6, window_bounds = array<i64: 1, 1, 128>}, {transform_indices = @transform_7, window_bounds = array<i64: 1, 1, 128>}]} {
    %c0 = arith.constant 0 : index
    %c0_0 = arith.constant 0 : index
    %0 = vector.load %arg1[%c0, %c0_0] : memref<64x128xbf16, #tpu.memory_space<vmem>>, vector<64x128xbf16>
    %c0_1 = arith.constant 0 : index
    %c0_2 = arith.constant 0 : index
    %1 = vector.load %arg4[%c0_1, %c0_2] : memref<128x128xbf16, #tpu.memory_space<vmem>>, vector<128x128xbf16>
    %cst = arith.constant dense<0.000000e+00> : vector<64x128xf32>
    %2 = tpu.matmul %0, %1, %cst {dimension_numbers = #tpu.dot_dimension_numbers<[1], [0], [0], [1], [0, 0, 1, 1], [], []>} : vector<64x128xbf16>, vector<128x128xbf16>, vector<64x128xf32> -> vector<64x128xf32>
    %c0_3 = arith.constant 0 : index
    %c0_4 = arith.constant 0 : index
    %3 = vector.load %arg5[%c0_3, %c0_4] : memref<1x128xf32, #tpu.memory_space<vmem>>, vector<1x128xf32>
    %4 = vector.broadcast %3 : vector<1x128xf32> to vector<64x128xf32>
    %5 = arith.addf %2, %4 : vector<64x128xf32>
    %6 = arith.truncf %5 : vector<64x128xf32> to vector<64x128xbf16>
    %c0_5 = arith.constant 0 : index
    %c0_6 = arith.constant 0 : index
    %7 = vector.load %arg6[%c0_5, %c0_6] : memref<64x128xbf16, #tpu.memory_space<vmem>>, vector<64x128xbf16>
    tpu.vector_store %arg6[%c0_5, %c0_6], %6 {strides = array<i32>} : memref<64x128xbf16, #tpu.memory_space<vmem>>, vector<64x128xbf16>,
    %cst_7 = arith.constant dense<0.000000e+00> : vector<128xf32>
    %8 = vector.multi_reduction <add>, %5, %cst_7 [0] : vector<64x128xf32> to vector<128xf32>
    %9 = vector.shape_cast %8 : vector<128xf32> to vector<1x128xf32>
    %cst_8 = arith.constant 1.562500e-02 : f32
    %10 = vector.broadcast %cst_8 : f32 to vector<1x128xf32>
    %11 = arith.mulf %9, %10 : vector<1x128xf32>
    %12 = vector.broadcast %11 : vector<1x128xf32> to vector<64x128xf32>
    %13 = arith.subf %5, %12 : vector<64x128xf32>
    %14 = vector.shape_cast %9 : vector<1x128xf32> to vector<1x1x128xf32>
    %c0_9 = arith.constant 0 : index
    %c0_10 = arith.constant 0 : index
    %c0_11 = arith.constant 0 : index
    %15 = vector.load %arg7[%c0_9, %c0_10, %c0_11] : memref<1x1x128xf32, #tpu.memory_space<vmem>>, vector<1x1x128xf32>
    tpu.vector_store %arg7[%c0_9, %c0_10, %c0_11], %14 {strides = array<i32>} : memref<1x1x128xf32, #tpu.memory_space<vmem>>, vector<1x1x128xf32>,
    %16 = arith.mulf %13, %13 : vector<64x128xf32>
    %cst_12 = arith.constant dense<0.000000e+00> : vector<128xf32>
    %17 = vector.multi_reduction <add>, %16, %cst_12 [0] : vector<64x128xf32> to vector<128xf32>
    %18 = vector.shape_cast %17 : vector<128xf32> to vector<1x128xf32>
    %19 = vector.shape_cast %18 : vector<1x128xf32> to vector<1x1x128xf32>
    %c0_13 = arith.constant 0 : index
    %c0_14 = arith.constant 0 : index
    %c0_15 = arith.constant 0 : index
    %20 = vector.load %arg8[%c0_13, %c0_14, %c0_15] : memref<1x1x128xf32, #tpu.memory_space<vmem>>, vector<1x1x128xf32>
    tpu.vector_store %arg8[%c0_13, %c0_14, %c0_15], %19 {strides = array<i32>} : memref<1x1x128xf32, #tpu.memory_space<vmem>>, vector<1x1x128xf32>,
    return
  }
  func.func @transform_0(%arg0: i32) -> (i32, i32) {
    %c0_i32 = arith.constant 0 : i32
    %c0_i32_0 = arith.constant 0 : i32
    return %arg0, %c0_i32 : i32, i32
  }
  func.func @transform_1(%arg0: i32) -> (i32, i32) {
    %c0_i32 = arith.constant 0 : i32
    %c0_i32_0 = arith.constant 0 : i32
    %c0_i32_1 = arith.constant 0 : i32
    return %c0_i32, %c0_i32_0 : i32, i32
  }
  func.func @transform_2(%arg0: i32) -> (i32, i32) {
    %c0_i32 = arith.constant 0 : i32
    %c0_i32_0 = arith.constant 0 : i32
    %c0_i32_1 = arith.constant 0 : i32
    return %c0_i32, %c0_i32_0 : i32, i32
  }
  func.func @transform_3(%arg0: i32) -> (i32, i32) {
    %c0_i32 = arith.constant 0 : i32
    %c0_i32_0 = arith.constant 0 : i32
    %c0_i32_1 = arith.constant 0 : i32
    return %c0_i32, %c0_i32_0 : i32, i32
  }
  func.func @transform_4(%arg0: i32) -> (i32, i32) {
    %c0_i32 = arith.constant 0 : i32
    %c0_i32_0 = arith.constant 0 : i32
    %c0_i32_1 = arith.constant 0 : i32
    return %c0_i32, %c0_i32_0 : i32, i32
  }
  func.func @transform_5(%arg0: i32) -> (i32, i32) {
    %c0_i32 = arith.constant 0 : i32
    %c0_i32_0 = arith.constant 0 : i32
    return %arg0, %c0_i32 : i32, i32
  }
  func.func @transform_6(%arg0: i32) -> (i32, i32, i32) {
    %c0_i32 = arith.constant 0 : i32
    %c0_i32_0 = arith.constant 0 : i32
    %c0_i32_1 = arith.constant 0 : i32
    return %arg0, %c0_i32, %c0_i32_0 : i32, i32, i32
  }
  func.func @transform_7(%arg0: i32) -> (i32, i32, i32) {
    %c0_i32 = arith.constant 0 : i32
    %c0_i32_0 = arith.constant 0 : i32
    %c0_i32_1 = arith.constant 0 : i32
    return %arg0, %c0_i32, %c0_i32_0 : i32, i32, i32
  }
}

module attributes {stable_mosaic.version = 11 : i64} {
  func.func @_conv_fused_kernel(%arg0: i32, %arg1: memref<16x512xbf16, #tpu.memory_space<vmem>>, %arg2: memref<1x512xf32, #tpu.memory_space<vmem>>, %arg3: memref<1x512xf32, #tpu.memory_space<vmem>>, %arg4: memref<512x128xbf16, #tpu.memory_space<vmem>>, %arg5: memref<1x128xf32, #tpu.memory_space<vmem>>, %arg6: memref<16x128xbf16, #tpu.memory_space<vmem>>, %arg7: memref<1x1x128xf32, #tpu.memory_space<vmem>>, %arg8: memref<1x1x128xf32, #tpu.memory_space<vmem>>) attributes {dimension_semantics = [#tpu.dimension_semantics<parallel>], iteration_bounds = array<i64: 2>, scalar_prefetch = 0 : i64, scratch_operands = 0 : i64, tpu.core_type = #tpu.core_type<tc>, window_params = [{transform_indices = @transform_0, window_bounds = array<i64: 16, 512>}, {pipeline_mode = #tpu.pipeline_mode<synchronous>, transform_indices = @transform_1, window_bounds = array<i64: 1, 512>}, {pipeline_mode = #tpu.pipeline_mode<synchronous>, transform_indices = @transform_2, window_bounds = array<i64: 1, 512>}, {pipeline_mode = #tpu.pipeline_mode<synchronous>, transform_indices = @transform_3, window_bounds = array<i64: 512, 128>}, {pipeline_mode = #tpu.pipeline_mode<synchronous>, transform_indices = @transform_4, window_bounds = array<i64: 1, 128>}, {transform_indices = @transform_5, window_bounds = array<i64: 16, 128>}, {transform_indices = @transform_6, window_bounds = array<i64: 1, 1, 128>}, {transform_indices = @transform_7, window_bounds = array<i64: 1, 1, 128>}]} {
    %c0 = arith.constant 0 : index
    %c0_0 = arith.constant 0 : index
    %0 = vector.load %arg1[%c0, %c0_0] : memref<16x512xbf16, #tpu.memory_space<vmem>>, vector<16x512xbf16>
    %1 = arith.extf %0 : vector<16x512xbf16> to vector<16x512xf32>
    %c0_1 = arith.constant 0 : index
    %c0_2 = arith.constant 0 : index
    %2 = vector.load %arg2[%c0_1, %c0_2] : memref<1x512xf32, #tpu.memory_space<vmem>>, vector<1x512xf32>
    %3 = vector.broadcast %2 : vector<1x512xf32> to vector<16x512xf32>
    %4 = arith.mulf %1, %3 : vector<16x512xf32>
    %c0_3 = arith.constant 0 : index
    %c0_4 = arith.constant 0 : index
    %5 = vector.load %arg3[%c0_3, %c0_4] : memref<1x512xf32, #tpu.memory_space<vmem>>, vector<1x512xf32>
    %6 = vector.broadcast %5 : vector<1x512xf32> to vector<16x512xf32>
    %7 = arith.addf %4, %6 : vector<16x512xf32>
    %cst = arith.constant 0.000000e+00 : f32
    %8 = vector.broadcast %cst : f32 to vector<16x512xf32>
    %9 = arith.maximumf %7, %8 : vector<16x512xf32>
    %10 = arith.truncf %9 : vector<16x512xf32> to vector<16x512xbf16>
    %c0_5 = arith.constant 0 : index
    %c0_6 = arith.constant 0 : index
    %11 = vector.load %arg4[%c0_5, %c0_6] : memref<512x128xbf16, #tpu.memory_space<vmem>>, vector<512x128xbf16>
    %cst_7 = arith.constant dense<0.000000e+00> : vector<16x128xf32>
    %12 = tpu.matmul %10, %11, %cst_7 {dimension_numbers = #tpu.dot_dimension_numbers<[1], [0], [0], [1], [0, 0, 1, 1], [], []>} : vector<16x512xbf16>, vector<512x128xbf16>, vector<16x128xf32> -> vector<16x128xf32>
    %c0_8 = arith.constant 0 : index
    %c0_9 = arith.constant 0 : index
    %13 = vector.load %arg5[%c0_8, %c0_9] : memref<1x128xf32, #tpu.memory_space<vmem>>, vector<1x128xf32>
    %14 = vector.broadcast %13 : vector<1x128xf32> to vector<16x128xf32>
    %15 = arith.addf %12, %14 : vector<16x128xf32>
    %16 = arith.truncf %15 : vector<16x128xf32> to vector<16x128xbf16>
    %c0_10 = arith.constant 0 : index
    %c0_11 = arith.constant 0 : index
    %17 = vector.load %arg6[%c0_10, %c0_11] : memref<16x128xbf16, #tpu.memory_space<vmem>>, vector<16x128xbf16>
    tpu.vector_store %arg6[%c0_10, %c0_11], %16 {strides = array<i32>} : memref<16x128xbf16, #tpu.memory_space<vmem>>, vector<16x128xbf16>,
    %cst_12 = arith.constant dense<0.000000e+00> : vector<128xf32>
    %18 = vector.multi_reduction <add>, %15, %cst_12 [0] : vector<16x128xf32> to vector<128xf32>
    %19 = vector.shape_cast %18 : vector<128xf32> to vector<1x128xf32>
    %cst_13 = arith.constant 6.250000e-02 : f32
    %20 = vector.broadcast %cst_13 : f32 to vector<1x128xf32>
    %21 = arith.mulf %19, %20 : vector<1x128xf32>
    %22 = vector.broadcast %21 : vector<1x128xf32> to vector<16x128xf32>
    %23 = arith.subf %15, %22 : vector<16x128xf32>
    %24 = vector.shape_cast %19 : vector<1x128xf32> to vector<1x1x128xf32>
    %c0_14 = arith.constant 0 : index
    %c0_15 = arith.constant 0 : index
    %c0_16 = arith.constant 0 : index
    %25 = vector.load %arg7[%c0_14, %c0_15, %c0_16] : memref<1x1x128xf32, #tpu.memory_space<vmem>>, vector<1x1x128xf32>
    tpu.vector_store %arg7[%c0_14, %c0_15, %c0_16], %24 {strides = array<i32>} : memref<1x1x128xf32, #tpu.memory_space<vmem>>, vector<1x1x128xf32>,
    %26 = arith.mulf %23, %23 : vector<16x128xf32>
    %cst_17 = arith.constant dense<0.000000e+00> : vector<128xf32>
    %27 = vector.multi_reduction <add>, %26, %cst_17 [0] : vector<16x128xf32> to vector<128xf32>
    %28 = vector.shape_cast %27 : vector<128xf32> to vector<1x128xf32>
    %29 = vector.shape_cast %28 : vector<1x128xf32> to vector<1x1x128xf32>
    %c0_18 = arith.constant 0 : index
    %c0_19 = arith.constant 0 : index
    %c0_20 = arith.constant 0 : index
    %30 = vector.load %arg8[%c0_18, %c0_19, %c0_20] : memref<1x1x128xf32, #tpu.memory_space<vmem>>, vector<1x1x128xf32>
    tpu.vector_store %arg8[%c0_18, %c0_19, %c0_20], %29 {strides = array<i32>} : memref<1x1x128xf32, #tpu.memory_space<vmem>>, vector<1x1x128xf32>,
    return
  }
  func.func @transform_0(%arg0: i32) -> (i32, i32) {
    %c0_i32 = arith.constant 0 : i32
    %c0_i32_0 = arith.constant 0 : i32
    return %arg0, %c0_i32 : i32, i32
  }
  func.func @transform_1(%arg0: i32) -> (i32, i32) {
    %c0_i32 = arith.constant 0 : i32
    %c0_i32_0 = arith.constant 0 : i32
    %c0_i32_1 = arith.constant 0 : i32
    return %c0_i32, %c0_i32_0 : i32, i32
  }
  func.func @transform_2(%arg0: i32) -> (i32, i32) {
    %c0_i32 = arith.constant 0 : i32
    %c0_i32_0 = arith.constant 0 : i32
    %c0_i32_1 = arith.constant 0 : i32
    return %c0_i32, %c0_i32_0 : i32, i32
  }
  func.func @transform_3(%arg0: i32) -> (i32, i32) {
    %c0_i32 = arith.constant 0 : i32
    %c0_i32_0 = arith.constant 0 : i32
    %c0_i32_1 = arith.constant 0 : i32
    return %c0_i32, %c0_i32_0 : i32, i32
  }
  func.func @transform_4(%arg0: i32) -> (i32, i32) {
    %c0_i32 = arith.constant 0 : i32
    %c0_i32_0 = arith.constant 0 : i32
    %c0_i32_1 = arith.constant 0 : i32
    return %c0_i32, %c0_i32_0 : i32, i32
  }
  func.func @transform_5(%arg0: i32) -> (i32, i32) {
    %c0_i32 = arith.constant 0 : i32
    %c0_i32_0 = arith.constant 0 : i32
    return %arg0, %c0_i32 : i32, i32
  }
  func.func @transform_6(%arg0: i32) -> (i32, i32, i32) {
    %c0_i32 = arith.constant 0 : i32
    %c0_i32_0 = arith.constant 0 : i32
    %c0_i32_1 = arith.constant 0 : i32
    return %arg0, %c0_i32, %c0_i32_0 : i32, i32, i32
  }
  func.func @transform_7(%arg0: i32) -> (i32, i32, i32) {
    %c0_i32 = arith.constant 0 : i32
    %c0_i32_0 = arith.constant 0 : i32
    %c0_i32_1 = arith.constant 0 : i32
    return %arg0, %c0_i32, %c0_i32_0 : i32, i32, i32
  }
}

module attributes {stable_mosaic.version = 11 : i64} {
  func.func @_conv_fused_kernel(%arg0: i32, %arg1: memref<8x1024xbf16, #tpu.memory_space<vmem>>, %arg2: memref<1x1024xf32, #tpu.memory_space<vmem>>, %arg3: memref<1x1024xf32, #tpu.memory_space<vmem>>, %arg4: memref<1024x128xbf16, #tpu.memory_space<vmem>>, %arg5: memref<1x128xf32, #tpu.memory_space<vmem>>, %arg6: memref<8x128xbf16, #tpu.memory_space<vmem>>, %arg7: memref<1x1x128xf32, #tpu.memory_space<vmem>>, %arg8: memref<1x1x128xf32, #tpu.memory_space<vmem>>) attributes {dimension_semantics = [#tpu.dimension_semantics<parallel>], iteration_bounds = array<i64: 1>, scalar_prefetch = 0 : i64, scratch_operands = 0 : i64, tpu.core_type = #tpu.core_type<tc>, window_params = [{transform_indices = @transform_0, window_bounds = array<i64: 8, 1024>}, {pipeline_mode = #tpu.pipeline_mode<synchronous>, transform_indices = @transform_1, window_bounds = array<i64: 1, 1024>}, {pipeline_mode = #tpu.pipeline_mode<synchronous>, transform_indices = @transform_2, window_bounds = array<i64: 1, 1024>}, {pipeline_mode = #tpu.pipeline_mode<synchronous>, transform_indices = @transform_3, window_bounds = array<i64: 1024, 128>}, {pipeline_mode = #tpu.pipeline_mode<synchronous>, transform_indices = @transform_4, window_bounds = array<i64: 1, 128>}, {transform_indices = @transform_5, window_bounds = array<i64: 8, 128>}, {transform_indices = @transform_6, window_bounds = array<i64: 1, 1, 128>}, {transform_indices = @transform_7, window_bounds = array<i64: 1, 1, 128>}]} {
    %c0 = arith.constant 0 : index
    %c0_0 = arith.constant 0 : index
    %0 = vector.load %arg1[%c0, %c0_0] : memref<8x1024xbf16, #tpu.memory_space<vmem>>, vector<8x1024xbf16>
    %1 = arith.extf %0 : vector<8x1024xbf16> to vector<8x1024xf32>
    %c0_1 = arith.constant 0 : index
    %c0_2 = arith.constant 0 : index
    %2 = vector.load %arg2[%c0_1, %c0_2] : memref<1x1024xf32, #tpu.memory_space<vmem>>, vector<1x1024xf32>
    %3 = vector.broadcast %2 : vector<1x1024xf32> to vector<8x1024xf32>
    %4 = arith.mulf %1, %3 : vector<8x1024xf32>
    %c0_3 = arith.constant 0 : index
    %c0_4 = arith.constant 0 : index
    %5 = vector.load %arg3[%c0_3, %c0_4] : memref<1x1024xf32, #tpu.memory_space<vmem>>, vector<1x1024xf32>
    %6 = vector.broadcast %5 : vector<1x1024xf32> to vector<8x1024xf32>
    %7 = arith.addf %4, %6 : vector<8x1024xf32>
    %cst = arith.constant 0.000000e+00 : f32
    %8 = vector.broadcast %cst : f32 to vector<8x1024xf32>
    %9 = arith.maximumf %7, %8 : vector<8x1024xf32>
    %10 = arith.truncf %9 : vector<8x1024xf32> to vector<8x1024xbf16>
    %c0_5 = arith.constant 0 : index
    %c0_6 = arith.constant 0 : index
    %11 = vector.load %arg4[%c0_5, %c0_6] : memref<1024x128xbf16, #tpu.memory_space<vmem>>, vector<1024x128xbf16>
    %cst_7 = arith.constant dense<0.000000e+00> : vector<8x128xf32>
    %12 = tpu.matmul %10, %11, %cst_7 {dimension_numbers = #tpu.dot_dimension_numbers<[1], [0], [0], [1], [0, 0, 1, 1], [], []>} : vector<8x1024xbf16>, vector<1024x128xbf16>, vector<8x128xf32> -> vector<8x128xf32>
    %c0_8 = arith.constant 0 : index
    %c0_9 = arith.constant 0 : index
    %13 = vector.load %arg5[%c0_8, %c0_9] : memref<1x128xf32, #tpu.memory_space<vmem>>, vector<1x128xf32>
    %14 = vector.broadcast %13 : vector<1x128xf32> to vector<8x128xf32>
    %15 = arith.addf %12, %14 : vector<8x128xf32>
    %16 = arith.truncf %15 : vector<8x128xf32> to vector<8x128xbf16>
    %c0_10 = arith.constant 0 : index
    %c0_11 = arith.constant 0 : index
    %17 = vector.load %arg6[%c0_10, %c0_11] : memref<8x128xbf16, #tpu.memory_space<vmem>>, vector<8x128xbf16>
    tpu.vector_store %arg6[%c0_10, %c0_11], %16 {strides = array<i32>} : memref<8x128xbf16, #tpu.memory_space<vmem>>, vector<8x128xbf16>,
    %cst_12 = arith.constant dense<0.000000e+00> : vector<128xf32>
    %18 = vector.multi_reduction <add>, %15, %cst_12 [0] : vector<8x128xf32> to vector<128xf32>
    %19 = vector.shape_cast %18 : vector<128xf32> to vector<1x128xf32>
    %cst_13 = arith.constant 1.250000e-01 : f32
    %20 = vector.broadcast %cst_13 : f32 to vector<1x128xf32>
    %21 = arith.mulf %19, %20 : vector<1x128xf32>
    %22 = vector.broadcast %21 : vector<1x128xf32> to vector<8x128xf32>
    %23 = arith.subf %15, %22 : vector<8x128xf32>
    %24 = vector.shape_cast %19 : vector<1x128xf32> to vector<1x1x128xf32>
    %c0_14 = arith.constant 0 : index
    %c0_15 = arith.constant 0 : index
    %c0_16 = arith.constant 0 : index
    %25 = vector.load %arg7[%c0_14, %c0_15, %c0_16] : memref<1x1x128xf32, #tpu.memory_space<vmem>>, vector<1x1x128xf32>
    tpu.vector_store %arg7[%c0_14, %c0_15, %c0_16], %24 {strides = array<i32>} : memref<1x1x128xf32, #tpu.memory_space<vmem>>, vector<1x1x128xf32>,
    %26 = arith.mulf %23, %23 : vector<8x128xf32>
    %cst_17 = arith.constant dense<0.000000e+00> : vector<128xf32>
    %27 = vector.multi_reduction <add>, %26, %cst_17 [0] : vector<8x128xf32> to vector<128xf32>
    %28 = vector.shape_cast %27 : vector<128xf32> to vector<1x128xf32>
    %29 = vector.shape_cast %28 : vector<1x128xf32> to vector<1x1x128xf32>
    %c0_18 = arith.constant 0 : index
    %c0_19 = arith.constant 0 : index
    %c0_20 = arith.constant 0 : index
    %30 = vector.load %arg8[%c0_18, %c0_19, %c0_20] : memref<1x1x128xf32, #tpu.memory_space<vmem>>, vector<1x1x128xf32>
    tpu.vector_store %arg8[%c0_18, %c0_19, %c0_20], %29 {strides = array<i32>} : memref<1x1x128xf32, #tpu.memory_space<vmem>>, vector<1x1x128xf32>,
    return
  }
  func.func @transform_0(%arg0: i32) -> (i32, i32) {
    %c0_i32 = arith.constant 0 : i32
    %c0_i32_0 = arith.constant 0 : i32
    return %arg0, %c0_i32 : i32, i32
  }
  func.func @transform_1(%arg0: i32) -> (i32, i32) {
    %c0_i32 = arith.constant 0 : i32
    %c0_i32_0 = arith.constant 0 : i32
    %c0_i32_1 = arith.constant 0 : i32
    return %c0_i32, %c0_i32_0 : i32, i32
  }
  func.func @transform_2(%arg0: i32) -> (i32, i32) {
    %c0_i32 = arith.constant 0 : i32
    %c0_i32_0 = arith.constant 0 : i32
    %c0_i32_1 = arith.constant 0 : i32
    return %c0_i32, %c0_i32_0 : i32, i32
  }
  func.func @transform_3(%arg0: i32) -> (i32, i32) {
    %c0_i32 = arith.constant 0 : i32
    %c0_i32_0 = arith.constant 0 : i32
    %c0_i32_1 = arith.constant 0 : i32
    return %c0_i32, %c0_i32_0 : i32, i32
  }
  func.func @transform_4(%arg0: i32) -> (i32, i32) {
    %c0_i32 = arith.constant 0 : i32
    %c0_i32_0 = arith.constant 0 : i32
    %c0_i32_1 = arith.constant 0 : i32
    return %c0_i32, %c0_i32_0 : i32, i32
  }
  func.func @transform_5(%arg0: i32) -> (i32, i32) {
    %c0_i32 = arith.constant 0 : i32
    %c0_i32_0 = arith.constant 0 : i32
    return %arg0, %c0_i32 : i32, i32
  }
  func.func @transform_6(%arg0: i32) -> (i32, i32, i32) {
    %c0_i32 = arith.constant 0 : i32
    %c0_i32_0 = arith.constant 0 : i32
    %c0_i32_1 = arith.constant 0 : i32
    return %arg0, %c0_i32, %c0_i32_0 : i32, i32, i32
  }
  func.func @transform_7(%arg0: i32) -> (i32, i32, i32) {
    %c0_i32 = arith.constant 0 : i32
    %c0_i32_0 = arith.constant 0 : i32
    %c0_i32_1 = arith.constant 0 : i32
    return %arg0, %c0_i32, %c0_i32_0 : i32, i32, i32
  }
}

module attributes {stable_mosaic.version = 11 : i64} {
  func.func @_bn_relu_pool_fc_kernel(%arg0: i32, %arg1: memref<8x4x128xbf16, #tpu.memory_space<vmem>>, %arg2: memref<1x128xf32, #tpu.memory_space<vmem>>, %arg3: memref<1x128xf32, #tpu.memory_space<vmem>>, %arg4: memref<128x128xf32, #tpu.memory_space<vmem>>, %arg5: memref<1x128xf32, #tpu.memory_space<vmem>>, %arg6: memref<8x128xf32, #tpu.memory_space<vmem>>) attributes {dimension_semantics = [#tpu.dimension_semantics<parallel>], iteration_bounds = array<i64: 1>, scalar_prefetch = 0 : i64, scratch_operands = 0 : i64, tpu.core_type = #tpu.core_type<tc>, window_params = [{transform_indices = @transform_0, window_bounds = array<i64: 8, 4, 128>}, {pipeline_mode = #tpu.pipeline_mode<synchronous>, transform_indices = @transform_1, window_bounds = array<i64: 1, 128>}, {pipeline_mode = #tpu.pipeline_mode<synchronous>, transform_indices = @transform_2, window_bounds = array<i64: 1, 128>}, {pipeline_mode = #tpu.pipeline_mode<synchronous>, transform_indices = @transform_3, window_bounds = array<i64: 128, 128>}, {pipeline_mode = #tpu.pipeline_mode<synchronous>, transform_indices = @transform_4, window_bounds = array<i64: 1, 128>}, {transform_indices = @transform_5, window_bounds = array<i64: 8, 128>}]} {
    %c0 = arith.constant 0 : index
    %c0_0 = arith.constant 0 : index
    %c0_1 = arith.constant 0 : index
    %0 = vector.load %arg1[%c0, %c0_0, %c0_1] : memref<8x4x128xbf16, #tpu.memory_space<vmem>>, vector<8x4x128xbf16>
    %1 = arith.extf %0 : vector<8x4x128xbf16> to vector<8x4x128xf32>
    %c0_2 = arith.constant 0 : index
    %c0_3 = arith.constant 0 : index
    %2 = vector.load %arg2[%c0_2, %c0_3] : memref<1x128xf32, #tpu.memory_space<vmem>>, vector<1x128xf32>
    %3 = vector.shape_cast %2 : vector<1x128xf32> to vector<1x1x128xf32>
    %4 = vector.broadcast %3 : vector<1x1x128xf32> to vector<8x4x128xf32>
    %5 = arith.mulf %1, %4 : vector<8x4x128xf32>
    %c0_4 = arith.constant 0 : index
    %c0_5 = arith.constant 0 : index
    %6 = vector.load %arg3[%c0_4, %c0_5] : memref<1x128xf32, #tpu.memory_space<vmem>>, vector<1x128xf32>
    %7 = vector.shape_cast %6 : vector<1x128xf32> to vector<1x1x128xf32>
    %8 = vector.broadcast %7 : vector<1x1x128xf32> to vector<8x4x128xf32>
    %9 = arith.addf %5, %8 : vector<8x4x128xf32>
    %cst = arith.constant 0.000000e+00 : f32
    %10 = vector.broadcast %cst : f32 to vector<8x4x128xf32>
    %11 = arith.maximumf %9, %10 : vector<8x4x128xf32>
    %cst_6 = arith.constant dense<0.000000e+00> : vector<8x128xf32>
    %12 = vector.multi_reduction <add>, %11, %cst_6 [1] : vector<8x4x128xf32> to vector<8x128xf32>
    %cst_7 = arith.constant 4.000000e+00 : f32
    %13 = vector.broadcast %cst_7 : f32 to vector<8x128xf32>
    %14 = arith.divf %12, %13 : vector<8x128xf32>
    %c0_8 = arith.constant 0 : index
    %c0_9 = arith.constant 0 : index
    %15 = vector.load %arg4[%c0_8, %c0_9] : memref<128x128xf32, #tpu.memory_space<vmem>>, vector<128x128xf32>
    %cst_10 = arith.constant dense<0.000000e+00> : vector<8x128xf32>
    %16 = tpu.matmul %14, %15, %cst_10 {dimension_numbers = #tpu.dot_dimension_numbers<[1], [0], [0], [1], [0, 0, 1, 1], [], []>} : vector<8x128xf32>, vector<128x128xf32>, vector<8x128xf32> -> vector<8x128xf32>
    %c0_11 = arith.constant 0 : index
    %c0_12 = arith.constant 0 : index
    %17 = vector.load %arg5[%c0_11, %c0_12] : memref<1x128xf32, #tpu.memory_space<vmem>>, vector<1x128xf32>
    %18 = vector.broadcast %17 : vector<1x128xf32> to vector<8x128xf32>
    %19 = arith.addf %16, %18 : vector<8x128xf32>
    %c0_13 = arith.constant 0 : index
    %c0_14 = arith.constant 0 : index
    %20 = vector.load %arg6[%c0_13, %c0_14] : memref<8x128xf32, #tpu.memory_space<vmem>>, vector<8x128xf32>
    tpu.vector_store %arg6[%c0_13, %c0_14], %19 {strides = array<i32>} : memref<8x128xf32, #tpu.memory_space<vmem>>, vector<8x128xf32>,
    return
  }
  func.func @transform_0(%arg0: i32) -> (i32, i32, i32) {
    %c0_i32 = arith.constant 0 : i32
    %c0_i32_0 = arith.constant 0 : i32
    %c0_i32_1 = arith.constant 0 : i32
    return %arg0, %c0_i32, %c0_i32_0 : i32, i32, i32
  }
  func.func @transform_1(%arg0: i32) -> (i32, i32) {
    %c0_i32 = arith.constant 0 : i32
    %c0_i32_0 = arith.constant 0 : i32
    %c0_i32_1 = arith.constant 0 : i32
    return %c0_i32, %c0_i32_0 : i32, i32
  }
  func.func @transform_2(%arg0: i32) -> (i32, i32) {
    %c0_i32 = arith.constant 0 : i32
    %c0_i32_0 = arith.constant 0 : i32
    %c0_i32_1 = arith.constant 0 : i32
    return %c0_i32, %c0_i32_0 : i32, i32
  }
  func.func @transform_3(%arg0: i32) -> (i32, i32) {
    %c0_i32 = arith.constant 0 : i32
    %c0_i32_0 = arith.constant 0 : i32
    %c0_i32_1 = arith.constant 0 : i32
    return %c0_i32, %c0_i32_0 : i32, i32
  }
  func.func @transform_4(%arg0: i32) -> (i32, i32) {
    %c0_i32 = arith.constant 0 : i32
    %c0_i32_0 = arith.constant 0 : i32
    %c0_i32_1 = arith.constant 0 : i32
    return %c0_i32, %c0_i32_0 : i32, i32
  }
  func.func @transform_5(%arg0: i32) -> (i32, i32) {
    %c0_i32 = arith.constant 0 : i32
    %c0_i32_0 = arith.constant 0 : i32
    return %arg0, %c0_i32 : i32, i32
  }
}

</mosaic_0001>

<llo_original>
// kernel: tile.23
$region0: #{tile.23}
  #allocation0 [shape = 's32[1]{0}', space=sflag, size = 0x4, scoped, tag = 'scoped memory for tile.23']
  %s0 = inlined_call_operand.vmem [shape: f32[32], index: 0, kind: input, shape index: {}]
  %s1 = inlined_call_operand.vmem [shape: f32[16,32], index: 1, kind: output, shape index: {}]
  // Predicated region
  $region2: #{tile.23} parent=0 // pred_check
    _
  $region3: #{tile.23} parent=0 // pred_check_branch
    %3 = sbr.rel (0) target = $region5
  $region4: #{tile.23} parent=0 // pred_region
    _
  $region5: #{tile.23} parent=0 // pred_fallthru
    _
  %v4 = vld [vmem:[%s0] ss:$0 sm:$0xff]
  %5 = vst [vmem:[%s1] sm:$0xff] %v4
  %s6 = scalar_lea.vmem %s1, 8
  %7 = vst [vmem:[%s6] sm:$0xff] %v4

// kernel: cnn_forward.4
$region0: #{cnn_forward.4}
  #allocation0 [shape = 'u32[]', space=smem, size = 0x4, offset = 0x4, fixed_abs, tag = 'smem constant byte address 0x4 - core index']
  #allocation1 [shape = 'u32[144,128]{1,0:T(1,128)}', space=vmem, size = 0x12000, scoped, tag = 'internal scratch']
  %s0 = inlined_call_operand.vmem [shape: bf16[128,128], index: 0, kind: input, shape index: {}]
  %s1 = inlined_call_operand.vmem [shape: f32[1,128], index: 1, kind: input, shape index: {}, may-alias: {1,2}]
  %s2 = inlined_call_operand.vmem [shape: f32[1,128], index: 2, kind: input, shape index: {}, may-alias: {1,2}]
  %s3 = inlined_call_operand.vmem [shape: bf16[128,128], index: 3, kind: input, shape index: {}]
  %s4 = inlined_call_operand.vmem [shape: f32[1,128], index: 4, kind: input, shape index: {}]
  %s5 = inlined_call_operand.vmem [shape: bf16[128,128], index: 5, kind: output, shape index: {0}]
  %s6 = inlined_call_operand.vmem [shape: f32[2,1,128], index: 6, kind: output, shape index: {1}]
  %s7 = inlined_call_operand.vmem [shape: f32[2,1,128], index: 7, kind: output, shape index: {2}]
  %8 = xla_tuple %s5, %s6, %s7
  %s9 = sld [smem:[#allocation0]]
  $region69: #{cnn_forward.4} parent=0
    _
  %s11 = ssub.s32 1, %s9
  %s12 = scalar_select 0, %s11, %s9
  loop: start=0, step=1, limit=4
  $region2: #{cnn_forward.4} parent=0 // loop_pre_header
    _
  $region3: #{cnn_forward.4} parent=0 // loop_header
    %s14 = sphi 0, %s18
    %p15 = scmp.ge.s32.totalorder %s14, 4
    %s24 = sphi 0, %s26
    %s27 = sphi 0, %s24
    %s28 = sphi 0, %s27
    %s44 = sphi 0, %s28
    %s48 = sphi 0, %s48
    %s50 = sphi 0, %s48
    %s51 = sphi 0, %s50
    %s65 = sphi 0, %s51
    %s69 = sphi 0, %s69
    %s71 = sphi 0, %s69
    %s72 = sphi 0, %s71
    %s86 = sphi 0, %s72
    %s90 = sphi 0, %s90
    %s92 = sphi 0, %s90
    %s93 = sphi 0, %s92
    %s107 = sphi 0, %s93
    %s111 = sphi 0, %s111
    %s113 = sphi 0, %s111
    %s114 = sphi 0, %s113
    %s128 = sphi 0, %s114
    %s134 = sphi 0, %s136
    %s137 = sphi 0, %s134
    %s138 = sphi 0, %s137
    %s154 = sphi 0, %s138
    %s160 = sphi 0, %s162
    %s163 = sphi 0, %s160
    %s164 = sphi 0, %s163
    %s180 = sphi 0, %s164
    %s186 = sphi 0, %s188
    %s189 = sphi 0, %s186
    %s190 = sphi 0, %s189
    %s206 = sphi 0, %s190
  $region4: #{cnn_forward.4} parent=0 // loop_header_branch
    %17 = sbr.rel (%p15) target = $region8
  $region5: #{cnn_forward.4} parent=0 // loop_body
    %s19 = ssub.s32 %s14, 1
    %s20 = ssub.s32 %s14, 2
    %s21 = sadd.s32 %s14, 1
    %s22 = ssub.s32 %s14, %s21
    %p23 = scmp.eq.s32.totalorder %s22, 0
    %s25 = sadd.s32 %s24, 1
    %s26 = scalar_select %p23, %s24, %s25
    %p29 = pneg %p23
    %p30 = scmp.eq.s32.totalorder %s14, 1
    %p31 = por %p29, %p30
    %p32 = scmp.ne.s32.totalorder %s24, %s27
    %p33 = scmp.eq.s32.totalorder %s14, 0
    %p34 = por %p32, %p33
    %p35 = scmp.ne.s32.totalorder %s24, %s27
    %p36 = scmp.eq.s32.totalorder %s19, 1
    %p37 = por %p35, %p36
    %p38 = scmp.ne.s32.totalorder %s27, %s28
    %p39 = scmp.eq.s32.totalorder %s19, 0
    %p40 = por %p38, %p39
    %p41 = scmp.ne.s32.totalorder %s27, %s28
    %p42 = scmp.eq.s32.totalorder %s20, 1
    %p43 = por %p41, %p42
    %p45 = scmp.ne.s32.totalorder %s28, %s44
    %p46 = scmp.eq.s32.totalorder %s20, 0
    %p47 = por %p45, %p46
    %s49 = sadd.s32 %s48, 1
    %p52 = scmp.eq.s32.totalorder %s14, 1
    %p53 = scmp.ne.s32.totalorder %s48, %s50
    %p54 = scmp.eq.s32.totalorder %s14, 0
    %p55 = por %p53, %p54
    %p56 = scmp.ne.s32.totalorder %s48, %s50
    %p57 = scmp.eq.s32.totalorder %s19, 1
    %p58 = por %p56, %p57
    %p59 = scmp.ne.s32.totalorder %s50, %s51
    %p60 = scmp.eq.s32.totalorder %s19, 0
    %p61 = por %p59, %p60
    %p62 = scmp.ne.s32.totalorder %s50, %s51
    %p63 = scmp.eq.s32.totalorder %s20, 1
    %p64 = por %p62, %p63
    %p66 = scmp.ne.s32.totalorder %s51, %s65
    %p67 = scmp.eq.s32.totalorder %s20, 0
    %p68 = por %p66, %p67
    %s70 = sadd.s32 %s69, 1
    %p73 = scmp.eq.s32.totalorder %s14, 1
    %p74 = scmp.ne.s32.totalorder %s69, %s71
    %p75 = scmp.eq.s32.totalorder %s14, 0
    %p76 = por %p74, %p75
    %p77 = scmp.ne.s32.totalorder %s69, %s71
    %p78 = scmp.eq.s32.totalorder %s19, 1
    %p79 = por %p77, %p78
    %p80 = scmp.ne.s32.totalorder %s71, %s72
    %p81 = scmp.eq.s32.totalorder %s19, 0
    %p82 = por %p80, %p81
    %p83 = scmp.ne.s32.totalorder %s71, %s72
    %p84 = scmp.eq.s32.totalorder %s20, 1
    %p85 = por %p83, %p84
    %p87 = scmp.ne.s32.totalorder %s72, %s86
    %p88 = scmp.eq.s32.totalorder %s20, 0
    %p89 = por %p87, %p88
    %s91 = sadd.s32 %s90, 1
    %p94 = scmp.eq.s32.totalorder %s14, 1
    %p95 = scmp.ne.s32.totalorder %s90, %s92
    %p96 = scmp.eq.s32.totalorder %s14, 0
    %p97 = por %p95, %p96
    %p98 = scmp.ne.s32.totalorder %s90, %s92
    %p99 = scmp.eq.s32.totalorder %s19, 1
    %p100 = por %p98, %p99
    %p101 = scmp.ne.s32.totalorder %s92, %s93
    %p102 = scmp.eq.s32.totalorder %s19, 0
    %p103 = por %p101, %p102
    %p104 = scmp.ne.s32.totalorder %s92, %s93
    %p105 = scmp.eq.s32.totalorder %s20, 1
    %p106 = por %p104, %p105
    %p108 = scmp.ne.s32.totalorder %s93, %s107
    %p109 = scmp.eq.s32.totalorder %s20, 0
    %p110 = por %p108, %p109
    %s112 = sadd.s32 %s111, 1
    %p115 = scmp.eq.s32.totalorder %s14, 1
    %p116 = scmp.ne.s32.totalorder %s111, %s113
    %p117 = scmp.eq.s32.totalorder %s14, 0
    %p118 = por %p116, %p117
    %p119 = scmp.ne.s32.totalorder %s111, %s113
    %p120 = scmp.eq.s32.totalorder %s19, 1
    %p121 = por %p119, %p120
    %p122 = scmp.ne.s32.totalorder %s113, %s114
    %p123 = scmp.eq.s32.totalorder %s19, 0
    %p124 = por %p122, %p123
    %p125 = scmp.ne.s32.totalorder %s113, %s114
    %p126 = scmp.eq.s32.totalorder %s20, 1
    %p127 = por %p125, %p126
    %p129 = scmp.ne.s32.totalorder %s114, %s128
    %p130 = scmp.eq.s32.totalorder %s20, 0
    %p131 = por %p129, %p130
    %s132 = ssub.s32 %s14, %s21
    %p133 = scmp.eq.s32.totalorder %s132, 0
    %s135 = sadd.s32 %s134, 1
    %s136 = scalar_select %p133, %s134, %s135
    %p139 = pneg %p133
    %p140 = scmp.eq.s32.totalorder %s14, 1
    %p141 = por %p139, %p140
    %p142 = scmp.ne.s32.totalorder %s134, %s137
    %p143 = scmp.eq.s32.totalorder %s14, 0
    %p144 = por %p142, %p143
    %p145 = scmp.ne.s32.totalorder %s134, %s137
    %p146 = scmp.eq.s32.totalorder %s19, 1
    %p147 = por %p145, %p146
    %p148 = scmp.ne.s32.totalorder %s137, %s138
    %p149 = scmp.eq.s32.totalorder %s19, 0
    %p150 = por %p148, %p149
    %p151 = scmp.ne.s32.totalorder %s137, %s138
    %p152 = scmp.eq.s32.totalorder %s20, 1
    %p153 = por %p151, %p152
    %p155 = scmp.ne.s32.totalorder %s138, %s154
    %p156 = scmp.eq.s32.totalorder %s20, 0
    %p157 = por %p155, %p156
    %s158 = ssub.s32 %s14, %s21
    %p159 = scmp.eq.s32.totalorder %s158, 0
    %s161 = sadd.s32 %s160, 1
    %s162 = scalar_select %p159, %s160, %s161
    %p165 = pneg %p159
    %p166 = scmp.eq.s32.totalorder %s14, 1
    %p167 = por %p165, %p166
    %p168 = scmp.ne.s32.totalorder %s160, %s163
    %p169 = scmp.eq.s32.totalorder %s14, 0
    %p170 = por %p168, %p169
    %p171 = scmp.ne.s32.totalorder %s160, %s163
    %p172 = scmp.eq.s32.totalorder %s19, 1
    %p173 = por %p171, %p172
    %p174 = scmp.ne.s32.totalorder %s163, %s164
    %p175 = scmp.eq.s32.totalorder %s19, 0
    %p176 = por %p174, %p175
    %p177 = scmp.ne.s32.totalorder %s163, %s164
    %p178 = scmp.eq.s32.totalorder %s20, 1
    %p179 = por %p177, %p178
    %p181 = scmp.ne.s32.totalorder %s164, %s180
    %p182 = scmp.eq.s32.totalorder %s20, 0
    %p183 = por %p181, %p182
    %s184 = ssub.s32 %s14, %s21
    %p185 = scmp.eq.s32.totalorder %s184, 0
    %s187 = sadd.s32 %s186, 1
    %s188 = scalar_select %p185, %s186, %s187
    %p191 = pneg %p185
    %p192 = scmp.eq.s32.totalorder %s14, 1
    %p193 = por %p191, %p192
    %p194 = scmp.ne.s32.totalorder %s186, %s189
    %p195 = scmp.eq.s32.totalorder %s14, 0
    %p196 = por %p194, %p195
    %p197 = scmp.ne.s32.totalorder %s186, %s189
    %p198 = scmp.eq.s32.totalorder %s19, 1
    %p199 = por %p197, %p198
    %p200 = scmp.ne.s32.totalorder %s189, %s190
    %p201 = scmp.eq.s32.totalorder %s19, 0
    %p202 = por %p200, %p201
    %p203 = scmp.ne.s32.totalorder %s189, %s190
    %p204 = scmp.eq.s32.totalorder %s20, 1
    %p205 = por %p203, %p204
    %p207 = scmp.ne.s32.totalorder %s190, %s206
    %p208 = scmp.eq.s32.totalorder %s20, 0
    %p209 = por %p207, %p208
    %p210 = scmp.le.s32.totalorder 1, %s14
    %p211 = scmp.lt.s32.totalorder %s14, 3
    %p212 = pnand %p210, %p211
    %p213 = pneg %p212
    // Predicated region
    $region9: #{cnn_forward.4} parent=5 // pred_check
      _
    $region10: #{cnn_forward.4} parent=5 // pred_check_branch
      %215 = sbr.rel (%p212) target = $region12
    $region11: #{cnn_forward.4} parent=5 // pred_region
      %s216 = ssub.s32 %s14, 1
      // Predicated region
      $region13: #{cnn_forward.4} parent=11 // pred_check
        %p217 = pneg %p61
      $region14: #{cnn_forward.4} parent=11 // pred_check_branch
        %219 = sbr.rel (%p217) target = $region16
      $region15: #{cnn_forward.4} parent=11 // pred_region
        _
      $region16: #{cnn_forward.4} parent=11 // pred_fallthru
        _
      // Predicated region
      $region17: #{cnn_forward.4} parent=11 // pred_check
        %p220 = pneg %p82
      $region18: #{cnn_forward.4} parent=11 // pred_check_branch
        %222 = sbr.rel (%p220) target = $region20
      $region19: #{cnn_forward.4} parent=11 // pred_region
        _
      $region20: #{cnn_forward.4} parent=11 // pred_fallthru
        _
      // Predicated region
      $region21: #{cnn_forward.4} parent=11 // pred_check
        %p223 = pneg %p103
      $region22: #{cnn_forward.4} parent=11 // pred_check_branch
        %225 = sbr.rel (%p223) target = $region24
      $region23: #{cnn_forward.4} parent=11 // pred_region
        _
      $region24: #{cnn_forward.4} parent=11 // pred_fallthru
        _
      // Predicated region
      $region25: #{cnn_forward.4} parent=11 // pred_check
        %p226 = pneg %p124
      $region26: #{cnn_forward.4} parent=11 // pred_check_branch
        %228 = sbr.rel (%p226) target = $region28
      $region27: #{cnn_forward.4} parent=11 // pred_region
        _
      $region28: #{cnn_forward.4} parent=11 // pred_fallthru
        _
    $region12: #{cnn_forward.4} parent=5 // pred_fallthru
      _
    %p229 = scmp.lt.s32.totalorder %s14, 2
    // Predicated region
    $region29: #{cnn_forward.4} parent=5 // pred_check
      %p230 = pneg %p229
    $region30: #{cnn_forward.4} parent=5 // pred_check_branch
      %232 = sbr.rel (%p230) target = $region32
    $region31: #{cnn_forward.4} parent=5 // pred_region
      // Predicated region
      $region33: #{cnn_forward.4} parent=31 // pred_check
        %p233 = pneg %p34
      $region34: #{cnn_forward.4} parent=31 // pred_check_branch
        %235 = sbr.rel (%p233) target = $region36
      $region35: #{cnn_forward.4} parent=31 // pred_region
        %s236 = smul.u32 8, %s14
        %p237 = scmp.lt.s32.totalorder %s236, 15
        %s238 = scalar_select %p237, %s236, 15
        %s239 = smul.addr %s238, 4
        %s240 = scalar_lea.vmem %s0, %s239
        %s241 = smul.u32 8, %s14
      $region36: #{cnn_forward.4} parent=31 // pred_fallthru
        _
    $region32: #{cnn_forward.4} parent=5 // pred_fallthru
      _
    %p242 = scmp.le.s32.totalorder 1, %s14
    %p243 = scmp.lt.s32.totalorder %s14, 3
    %p244 = pnand %p242, %p243
    %p245 = pneg %p244
    // Predicated region
    $region37: #{cnn_forward.4} parent=5 // pred_check
      _
    $region38: #{cnn_forward.4} parent=5 // pred_check_branch
      %247 = sbr.rel (%p244) target = $region40
    $region39: #{cnn_forward.4} parent=5 // pred_region
      %s248 = ssub.s32 %s14, 1
      %s249 = smul.u32 8, %s19
      %p250 = scmp.lt.s32.totalorder %s249, 15
      %s251 = scalar_select %p250, %s249, 15
      %s252 = smul.addr %s251, 4
      %s253 = scalar_lea.vmem %s0, %s252
      %p254 = pneg %p40
      %p255 = pneg %p37
      %p256 = pneg %p61
      %p257 = pneg %p58
      %p258 = pneg %p82
      %p259 = pneg %p79
      %p260 = pneg %p103
      %p261 = pneg %p100
      %p262 = pneg %p124
      %p263 = pneg %p121
      %p264 = pneg %p150
      %p265 = pneg %p147
      %s266 = smul.u32 8, %s19
      %p267 = scmp.lt.s32.totalorder %s266, 15
      %s268 = scalar_select %p267, %s266, 15
      %s269 = smul.addr %s268, 4
      %s270 = scalar_lea.vmem %s5, %s269
      %p271 = pneg %p176
      %p272 = pneg %p173
      %p273 = scmp.lt.s32.totalorder %s19, 1
      %s274 = scalar_select %p273, %s19, 1
      %s275 = scalar_lea.vmem %s6, %s274
      %p276 = pneg %p202
      %p277 = pneg %p199
      %p278 = scmp.lt.s32.totalorder %s19, 1
      %s279 = scalar_select %p278, %s19, 1
      %s280 = scalar_lea.vmem %s7, %s279
      %s281 = smul.u32 8, %s19
      %p282 = scmp.lt.s32.totalorder %s281, 15
      %s283 = scalar_select %p282, %s281, 15
      %s284 = smul.addr %s283, 4
      %s285 = scalar_lea.vmem %s0, %s284
      %s286 = smul.u32 8, %s19
      %s287 = smul.u32 8, %s19
      %p288 = scmp.lt.s32.totalorder %s287, 15
      %s289 = scalar_select %p288, %s287, 15
      %s290 = smul.addr %s289, 4
      %s291 = scalar_lea.vmem %s5, %s290
      %s292 = smul.u32 8, %s19
      %p293 = scmp.lt.s32.totalorder %s19, 1
      %s294 = scalar_select %p293, %s19, 1
      %s295 = scalar_lea.vmem %s6, %s294
      %p296 = scmp.lt.s32.totalorder %s19, 1
      %s297 = scalar_select %p296, %s19, 1
      %s298 = scalar_lea.vmem %s7, %s297
      %v300 = vld [vmem:[%s285] sm:$0xf]
      %v301 = vld [vmem:[%s285 + $0x4] sm:$0xf]
      %v302 = vld [vmem:[%s285 + $0x8] sm:$0xf]
      %v303 = vld [vmem:[%s285 + $0xc] sm:$0xf]
      %v304 = vld [vmem:[%s285 + $0x10] sm:$0xf]
      %v305 = vld [vmem:[%s285 + $0x14] sm:$0xf]
      %v306 = vld [vmem:[%s285 + $0x18] sm:$0xf]
      %v307 = vld [vmem:[%s285 + $0x1c] sm:$0xf]
      %v308 = vld [vmem:[%s3] sm:$0xf]
      %v309 = vld [vmem:[%s3 + $0x4] sm:$0xf]
      %v310 = vld [vmem:[%s3 + $0x8] sm:$0xf]
      %v311 = vld [vmem:[%s3 + $0xc] sm:$0xf]
      %v312 = vld [vmem:[%s3 + $0x10] sm:$0xf]
      %v313 = vld [vmem:[%s3 + $0x14] sm:$0xf]
      %v314 = vld [vmem:[%s3 + $0x18] sm:$0xf]
      %v315 = vld [vmem:[%s3 + $0x1c] sm:$0xf]
      %v316 = vld [vmem:[%s3 + $0x20] sm:$0xf]
      %v317 = vld [vmem:[%s3 + $0x24] sm:$0xf]
      %v318 = vld [vmem:[%s3 + $0x28] sm:$0xf]
      %v319 = vld [vmem:[%s3 + $0x2c] sm:$0xf]
      %v320 = vld [vmem:[%s3 + $0x30] sm:$0xf]
      %v321 = vld [vmem:[%s3 + $0x34] sm:$0xf]
      %v322 = vld [vmem:[%s3 + $0x38] sm:$0xf]
      %v323 = vld [vmem:[%s3 + $0x3c] sm:$0xf]
      %v324 = vld [vmem:[%s4] sm:$0x1]
      %v326 = vlaneseq
      %v327 = vshrl.u32 %v326, 7
      %v328 = vsub.s32 0, %v327
      %v329 = vrot.slane %v324, %v328
      %v339 = vunpack.c.l.b16 %v300
      %v340 = vunpack.c.l.b16 %v301
      %v341 = vunpack.c.l.b16 %v302
      %v342 = vunpack.c.l.b16 %v303
      %v343 = vunpack.c.l.b16 %v304
      %v344 = vunpack.c.l.b16 %v305
      %v345 = vunpack.c.l.b16 %v306
      %v346 = vunpack.c.l.b16 %v307
      %v347 = vpack.c.b16 %v340, %v339
      %v348 = vpack.c.b16 %v342, %v341
      %v349 = vpack.c.b16 %v344, %v343
      %v350 = vpack.c.b16 %v346, %v345
      %v371 = vunpack.c.l.b16 %v308
      %v372 = vunpack.c.l.b16 %v309
      %v373 = vunpack.c.l.b16 %v310
      %v374 = vunpack.c.l.b16 %v311
      %v375 = vunpack.c.l.b16 %v312
      %v376 = vunpack.c.l.b16 %v313
      %v377 = vunpack.c.l.b16 %v314
      %v378 = vunpack.c.l.b16 %v315
      %v379 = vunpack.c.l.b16 %v316
      %v380 = vunpack.c.l.b16 %v317
      %v381 = vunpack.c.l.b16 %v318
      %v382 = vunpack.c.l.b16 %v319
      %v383 = vunpack.c.l.b16 %v320
      %v384 = vunpack.c.l.b16 %v321
      %v385 = vunpack.c.l.b16 %v322
      %v386 = vunpack.c.l.b16 %v323
      %v387 = vpack.c.b16 %v372, %v371
      %v388 = vpack.c.b16 %v374, %v373
      %v389 = vpack.c.b16 %v376, %v375
      %v390 = vpack.c.b16 %v378, %v377
      %v391 = vpack.c.b16 %v380, %v379
      %v392 = vpack.c.b16 %v382, %v381
      %v393 = vpack.c.b16 %v384, %v383
      %v394 = vpack.c.b16 %v386, %v385
      %403 = vmatprep.subr.bf16.mxu0 0
      %404 = vmatpush1.bf16.msra.mxu0 %v394
      %405 = vmatprep.subr.bf16.mxu0 0
      %406 = vmatpush1.bf16.msra.mxu0 %v393
      %407 = vmatprep.subr.bf16.mxu0 0
      %408 = vmatpush1.bf16.msra.mxu0 %v392
      %409 = vmatprep.subr.bf16.mxu0 0
      %410 = vmatpush1.bf16.msra.mxu0 %v391
      %411 = vmatprep.subr.bf16.mxu0 0
      %412 = vmatpush1.bf16.msra.mxu0 %v390
      %413 = vmatprep.subr.bf16.mxu0 0
      %414 = vmatpush1.bf16.msra.mxu0 %v389
      %415 = vmatprep.subr.bf16.mxu0 0
      %416 = vmatpush1.bf16.msra.mxu0 %v388
      %417 = vmatprep.subr.bf16.mxu0 0
      %418 = vmatpush1.bf16.msra.mxu0 %v387
      %419 = vmatprep.subr.bf16.mxu0 0
      %420 = vmatpush2.bf16.msra.mxu0 0
      %421 = vmatprep.subr.bf16.mxu0 0
      %422 = vmatpush2.bf16.msra.mxu0 0
      %423 = vmatprep.subr.bf16.mxu0 0
      %424 = vmatpush2.bf16.msra.mxu0 0
      %425 = vmatprep.subr.bf16.mxu0 0
      %426 = vmatpush2.bf16.msra.mxu0 0
      %427 = vmatprep.subr.bf16.mxu0 0
      %428 = vmatpush2.bf16.msra.mxu0 0
      %429 = vmatprep.subr.bf16.mxu0 0
      %430 = vmatpush2.bf16.msra.mxu0 0
      %431 = vmatprep.subr.bf16.mxu0 0
      %432 = vmatpush2.bf16.msra.mxu0 0
      %433 = vmatprep.subr.bf16.mxu0 0
      %434 = vmatpush2.bf16.msra.mxu0 0
      %435 = vmatprep.mubr.bf16.mxu0 0
      %436 = vmatmul.mubr.bf16.gmra.mxu0 %v347
      %v437 = vpop.f32.mrf.mxu0
      %v438 = vadd.f32 %v329, %v437
      %v439 = vpop.f32.mrf.mxu0
      %v440 = vpop.f32.mrf.mxu0
      %v441 = vadd.f32 %v329, %v440
      %v442 = vpop.f32.mrf.mxu0
      %443 = vmatprep.mubr.bf16.mxu0 0
      %444 = vmatmul.mubr.bf16.gmra.mxu0 %v348
      %v445 = vpop.f32.mrf.mxu0
      %v446 = vadd.f32 %v329, %v445
      %v447 = vpop.f32.mrf.mxu0
      %v448 = vpop.f32.mrf.mxu0
      %v449 = vadd.f32 %v329, %v448
      %v450 = vpop.f32.mrf.mxu0
      %451 = vmatprep.mubr.bf16.mxu0 0
      %452 = vmatmul.mubr.bf16.gmra.mxu0 %v349
      %v453 = vpop.f32.mrf.mxu0
      %v454 = vadd.f32 %v329, %v453
      %v455 = vpop.f32.mrf.mxu0
      %v456 = vpop.f32.mrf.mxu0
      %v457 = vadd.f32 %v329, %v456
      %v458 = vpop.f32.mrf.mxu0
      %459 = vmatprep.mubr.bf16.mxu0 0
      %460 = vmatmul.mubr.bf16.gmra.mxu0 %v350
      %v461 = vpop.f32.mrf.mxu0
      %v462 = vadd.f32 %v329, %v461
      %v463 = vpop.f32.mrf.mxu0
      %v464 = vpop.f32.mrf.mxu0
      %v465 = vadd.f32 %v329, %v464
      %v466 = vpop.f32.mrf.mxu0
      %467 = vdwg.mxu0
      %v468 = vpack.c.bf16 %v441, %v438
      %v469 = vpack.c.bf16 %v449, %v446
      %v470 = vpack.c.bf16 %v457, %v454
      %v471 = vpack.c.bf16 %v465, %v462
      %v476 = vunpack.c.l.b16 %v468
      %v477 = vunpack.c.h.b16 %v468
      %v478 = vunpack.c.l.b16 %v469
      %v479 = vunpack.c.h.b16 %v469
      %v480 = vunpack.c.l.b16 %v470
      %v481 = vunpack.c.h.b16 %v470
      %v482 = vunpack.c.l.b16 %v471
      %v483 = vunpack.c.h.b16 %v471
      %v484 = vpack.c.b16 %v476, %v476
      %v485 = vpack.c.b16 %v477, %v477
      %v486 = vpack.c.b16 %v478, %v478
      %v487 = vpack.c.b16 %v479, %v479
      %v488 = vpack.c.b16 %v480, %v480
      %v489 = vpack.c.b16 %v481, %v481
      %v490 = vpack.c.b16 %v482, %v482
      %v491 = vpack.c.b16 %v483, %v483
      %500 = vst [vmem:[%s291] sm:$0xf] %v484
      %501 = vst [vmem:[%s291 + $0x4] sm:$0xf] %v485
      %502 = vst [vmem:[%s291 + $0x8] sm:$0xf] %v486
      %503 = vst [vmem:[%s291 + $0xc] sm:$0xf] %v487
      %504 = vst [vmem:[%s291 + $0x10] sm:$0xf] %v488
      %505 = vst [vmem:[%s291 + $0x14] sm:$0xf] %v489
      %506 = vst [vmem:[%s291 + $0x18] sm:$0xf] %v490
      %507 = vst [vmem:[%s291 + $0x1c] sm:$0xf] %v491
      %v508 = vadd.f32 %v438, %v441
      %v509 = vadd.f32 %v508, %v446
      %v510 = vadd.f32 %v509, %v449
      %v511 = vadd.f32 %v510, %v454
      %v512 = vadd.f32 %v511, %v457
      %v513 = vadd.f32 %v512, %v462
      %v514 = vadd.f32 %v513, %v465
      %v515 = vrot.slane %v514, 4
      %v516 = vadd.f32 %v514, %v515
      %v517 = vrot.slane %v516, 2
      %v518 = vadd.f32 %v516, %v517
      %v519 = vrot.slane %v518, 1
      %v520 = vadd.f32 %v518, %v519
      %v521 = vmul.f32 %v520, 0.015625
      %v522 = vsub.f32 %v438, %v521
      %v523 = vsub.f32 %v441, %v521
      %v524 = vsub.f32 %v446, %v521
      %v525 = vsub.f32 %v449, %v521
      %v526 = vsub.f32 %v454, %v521
      %v527 = vsub.f32 %v457, %v521
      %v528 = vsub.f32 %v462, %v521
      %v529 = vsub.f32 %v465, %v521
      %530 = vst [vmem:[%s295] sm:$0x1] %v520
      %v531 = vmul.f32 %v522, %v522
      %v532 = vmul.f32 %v523, %v523
      %v533 = vmul.f32 %v524, %v524
      %v534 = vmul.f32 %v525, %v525
      %v535 = vmul.f32 %v526, %v526
      %v536 = vmul.f32 %v527, %v527
      %v537 = vmul.f32 %v528, %v528
      %v538 = vmul.f32 %v529, %v529
      %v539 = vadd.f32 %v531, %v532
      %v540 = vadd.f32 %v539, %v533
      %v541 = vadd.f32 %v540, %v534
      %v542 = vadd.f32 %v541, %v535
      %v543 = vadd.f32 %v542, %v536
      %v544 = vadd.f32 %v543, %v537
      %v545 = vadd.f32 %v544, %v538
      %v546 = vrot.slane %v545, 4
      %v547 = vadd.f32 %v545, %v546
      %v548 = vrot.slane %v547, 2
      %v549 = vadd.f32 %v547, %v548
      %v550 = vrot.slane %v549, 1
      %v551 = vadd.f32 %v549, %v550
      %552 = vst [vmem:[%s298] sm:$0x1] %v551
      %s553 = smul.u32 8, %s19
      %p554 = scmp.lt.s32.totalorder %s553, 15
      %s555 = scalar_select %p554, %s553, 15
      %s556 = smul.addr %s555, 4
      %s557 = scalar_lea.vmem %s5, %s556
      %p558 = scmp.lt.s32.totalorder %s19, 1
      %s559 = scalar_select %p558, %s19, 1
      %s560 = scalar_lea.vmem %s6, %s559
      %p561 = scmp.lt.s32.totalorder %s19, 1
      %s562 = scalar_select %p561, %s19, 1
      %s563 = scalar_lea.vmem %s7, %s562
      // Predicated region
      $region41: #{cnn_forward.4} parent=39 // pred_check
        %p564 = pneg %p147
      $region42: #{cnn_forward.4} parent=39 // pred_check_branch
        %566 = sbr.rel (%p564) target = $region44
      $region43: #{cnn_forward.4} parent=39 // pred_region
        %s567 = smul.u32 8, %s19
      $region44: #{cnn_forward.4} parent=39 // pred_fallthru
        _
      // Predicated region
      $region45: #{cnn_forward.4} parent=39 // pred_check
        %p568 = pneg %p173
      $region46: #{cnn_forward.4} parent=39 // pred_check_branch
        %570 = sbr.rel (%p568) target = $region48
      $region47: #{cnn_forward.4} parent=39 // pred_region
        _
      $region48: #{cnn_forward.4} parent=39 // pred_fallthru
        _
      // Predicated region
      $region49: #{cnn_forward.4} parent=39 // pred_check
        %p571 = pneg %p199
      $region50: #{cnn_forward.4} parent=39 // pred_check_branch
        %573 = sbr.rel (%p571) target = $region52
      $region51: #{cnn_forward.4} parent=39 // pred_region
        _
      $region52: #{cnn_forward.4} parent=39 // pred_fallthru
        _
    $region40: #{cnn_forward.4} parent=5 // pred_fallthru
      _
    %p574 = scmp.le.s32.totalorder 2, %s14
    // Predicated region
    $region53: #{cnn_forward.4} parent=5 // pred_check
      %p575 = pneg %p574
    $region54: #{cnn_forward.4} parent=5 // pred_check_branch
      %577 = sbr.rel (%p575) target = $region56
    $region55: #{cnn_forward.4} parent=5 // pred_region
      %s578 = ssub.s32 %s14, 2
      // Predicated region
      $region57: #{cnn_forward.4} parent=55 // pred_check
        %p579 = pneg %p153
      $region58: #{cnn_forward.4} parent=55 // pred_check_branch
        %581 = sbr.rel (%p579) target = $region60
      $region59: #{cnn_forward.4} parent=55 // pred_region
        %s582 = smul.u32 8, %s20
        %p583 = scmp.lt.s32.totalorder %s582, 15
        %s584 = scalar_select %p583, %s582, 15
        %s585 = smul.addr %s584, 4
        %s586 = scalar_lea.vmem %s5, %s585
      $region60: #{cnn_forward.4} parent=55 // pred_fallthru
        _
      // Predicated region
      $region61: #{cnn_forward.4} parent=55 // pred_check
        %p587 = pneg %p179
      $region62: #{cnn_forward.4} parent=55 // pred_check_branch
        %589 = sbr.rel (%p587) target = $region64
      $region63: #{cnn_forward.4} parent=55 // pred_region
        %p590 = scmp.lt.s32.totalorder %s20, 1
        %s591 = scalar_select %p590, %s20, 1
        %s592 = scalar_lea.vmem %s6, %s591
      $region64: #{cnn_forward.4} parent=55 // pred_fallthru
        _
      // Predicated region
      $region65: #{cnn_forward.4} parent=55 // pred_check
        %p593 = pneg %p205
      $region66: #{cnn_forward.4} parent=55 // pred_check_branch
        %595 = sbr.rel (%p593) target = $region68
      $region67: #{cnn_forward.4} parent=55 // pred_region
        %p596 = scmp.lt.s32.totalorder %s20, 1
        %s597 = scalar_select %p596, %s20, 1
        %s598 = scalar_lea.vmem %s7, %s597
      $region68: #{cnn_forward.4} parent=55 // pred_fallthru
        _
    $region56: #{cnn_forward.4} parent=5 // pred_fallthru
      _
  $region6: #{cnn_forward.4} parent=0 // loop_footer
    %s18 = sadd.s32 1, %s14
  $region7: #{cnn_forward.4} parent=0 // loop_footer_branch
    %13 = sbr.rel target = $region3
  $region8: #{cnn_forward.4} parent=0 // loop_exit
    _

// kernel: tile.33
$region0: #{tile.33}
  #allocation0 [shape = 's32[1]{0}', space=sflag, size = 0x4, scoped, tag = 'scoped memory for tile.33']
  %s0 = inlined_call_operand.vmem [shape: f32[64], index: 0, kind: input, shape index: {}]
  %s1 = inlined_call_operand.vmem [shape: f32[16,64], index: 1, kind: output, shape index: {}]
  // Predicated region
  $region2: #{tile.33} parent=0 // pred_check
    _
  $region3: #{tile.33} parent=0 // pred_check_branch
    %3 = sbr.rel (0) target = $region5
  $region4: #{tile.33} parent=0 // pred_region
    _
  $region5: #{tile.33} parent=0 // pred_fallthru
    _
  %v4 = vld [vmem:[%s0] ss:$0 sm:$0xff]
  %5 = vst [vmem:[%s1] sm:$0xff] %v4
  %s6 = scalar_lea.vmem %s1, 8
  %7 = vst [vmem:[%s6] sm:$0xff] %v4

// kernel: cnn_forward.5
$region0: #{cnn_forward.5}
  #allocation0 [shape = 'u32[]', space=smem, size = 0x4, offset = 0x4, fixed_abs, tag = 'smem constant byte address 0x4 - core index']
  #allocation1 [shape = 'u32[144,128]{1,0:T(1,128)}', space=vmem, size = 0x12000, scoped, tag = 'internal scratch']
  %s0 = inlined_call_operand.vmem [shape: bf16[32,512], index: 0, kind: input, shape index: {}]
  %s1 = inlined_call_operand.vmem [shape: f32[1,512], index: 1, kind: input, shape index: {}]
  %s2 = inlined_call_operand.vmem [shape: f32[1,512], index: 2, kind: input, shape index: {}]
  %s3 = inlined_call_operand.vmem [shape: bf16[512,128], index: 3, kind: input, shape index: {}]
  %s4 = inlined_call_operand.vmem [shape: f32[1,128], index: 4, kind: input, shape index: {}]
  %s5 = inlined_call_operand.vmem [shape: bf16[32,128], index: 5, kind: output, shape index: {0}]
  %s6 = inlined_call_operand.vmem [shape: f32[2,1,128], index: 6, kind: output, shape index: {1}]
  %s7 = inlined_call_operand.vmem [shape: f32[2,1,128], index: 7, kind: output, shape index: {2}]
  %8 = xla_tuple %s5, %s6, %s7
  %s9 = sld [smem:[#allocation0]]
  $region69: #{cnn_forward.5} parent=0
    _
  %s11 = ssub.s32 1, %s9
  %s12 = scalar_select 0, %s11, %s9
  loop: start=0, step=1, limit=4
  $region2: #{cnn_forward.5} parent=0 // loop_pre_header
    _
  $region3: #{cnn_forward.5} parent=0 // loop_header
    %s14 = sphi 0, %s18
    %p15 = scmp.ge.s32.totalorder %s14, 4
    %s24 = sphi 0, %s26
    %s27 = sphi 0, %s24
    %s28 = sphi 0, %s27
    %s44 = sphi 0, %s28
    %s48 = sphi 0, %s48
    %s50 = sphi 0, %s48
    %s51 = sphi 0, %s50
    %s65 = sphi 0, %s51
    %s69 = sphi 0, %s69
    %s71 = sphi 0, %s69
    %s72 = sphi 0, %s71
    %s86 = sphi 0, %s72
    %s90 = sphi 0, %s90
    %s92 = sphi 0, %s90
    %s93 = sphi 0, %s92
    %s107 = sphi 0, %s93
    %s111 = sphi 0, %s111
    %s113 = sphi 0, %s111
    %s114 = sphi 0, %s113
    %s128 = sphi 0, %s114
    %s134 = sphi 0, %s136
    %s137 = sphi 0, %s134
    %s138 = sphi 0, %s137
    %s154 = sphi 0, %s138
    %s160 = sphi 0, %s162
    %s163 = sphi 0, %s160
    %s164 = sphi 0, %s163
    %s180 = sphi 0, %s164
    %s186 = sphi 0, %s188
    %s189 = sphi 0, %s186
    %s190 = sphi 0, %s189
    %s206 = sphi 0, %s190
  $region4: #{cnn_forward.5} parent=0 // loop_header_branch
    %17 = sbr.rel (%p15) target = $region8
  $region5: #{cnn_forward.5} parent=0 // loop_body
    %s19 = ssub.s32 %s14, 1
    %s20 = ssub.s32 %s14, 2
    %s21 = sadd.s32 %s14, 1
    %s22 = ssub.s32 %s14, %s21
    %p23 = scmp.eq.s32.totalorder %s22, 0
    %s25 = sadd.s32 %s24, 1
    %s26 = scalar_select %p23, %s24, %s25
    %p29 = pneg %p23
    %p30 = scmp.eq.s32.totalorder %s14, 1
    %p31 = por %p29, %p30
    %p32 = scmp.ne.s32.totalorder %s24, %s27
    %p33 = scmp.eq.s32.totalorder %s14, 0
    %p34 = por %p32, %p33
    %p35 = scmp.ne.s32.totalorder %s24, %s27
    %p36 = scmp.eq.s32.totalorder %s19, 1
    %p37 = por %p35, %p36
    %p38 = scmp.ne.s32.totalorder %s27, %s28
    %p39 = scmp.eq.s32.totalorder %s19, 0
    %p40 = por %p38, %p39
    %p41 = scmp.ne.s32.totalorder %s27, %s28
    %p42 = scmp.eq.s32.totalorder %s20, 1
    %p43 = por %p41, %p42
    %p45 = scmp.ne.s32.totalorder %s28, %s44
    %p46 = scmp.eq.s32.totalorder %s20, 0
    %p47 = por %p45, %p46
    %s49 = sadd.s32 %s48, 1
    %p52 = scmp.eq.s32.totalorder %s14, 1
    %p53 = scmp.ne.s32.totalorder %s48, %s50
    %p54 = scmp.eq.s32.totalorder %s14, 0
    %p55 = por %p53, %p54
    %p56 = scmp.ne.s32.totalorder %s48, %s50
    %p57 = scmp.eq.s32.totalorder %s19, 1
    %p58 = por %p56, %p57
    %p59 = scmp.ne.s32.totalorder %s50, %s51
    %p60 = scmp.eq.s32.totalorder %s19, 0
    %p61 = por %p59, %p60
    %p62 = scmp.ne.s32.totalorder %s50, %s51
    %p63 = scmp.eq.s32.totalorder %s20, 1
    %p64 = por %p62, %p63
    %p66 = scmp.ne.s32.totalorder %s51, %s65
    %p67 = scmp.eq.s32.totalorder %s20, 0
    %p68 = por %p66, %p67
    %s70 = sadd.s32 %s69, 1
    %p73 = scmp.eq.s32.totalorder %s14, 1
    %p74 = scmp.ne.s32.totalorder %s69, %s71
    %p75 = scmp.eq.s32.totalorder %s14, 0
    %p76 = por %p74, %p75
    %p77 = scmp.ne.s32.totalorder %s69, %s71
    %p78 = scmp.eq.s32.totalorder %s19, 1
    %p79 = por %p77, %p78
    %p80 = scmp.ne.s32.totalorder %s71, %s72
    %p81 = scmp.eq.s32.totalorder %s19, 0
    %p82 = por %p80, %p81
    %p83 = scmp.ne.s32.totalorder %s71, %s72
    %p84 = scmp.eq.s32.totalorder %s20, 1
    %p85 = por %p83, %p84
    %p87 = scmp.ne.s32.totalorder %s72, %s86
    %p88 = scmp.eq.s32.totalorder %s20, 0
    %p89 = por %p87, %p88
    %s91 = sadd.s32 %s90, 1
    %p94 = scmp.eq.s32.totalorder %s14, 1
    %p95 = scmp.ne.s32.totalorder %s90, %s92
    %p96 = scmp.eq.s32.totalorder %s14, 0
    %p97 = por %p95, %p96
    %p98 = scmp.ne.s32.totalorder %s90, %s92
    %p99 = scmp.eq.s32.totalorder %s19, 1
    %p100 = por %p98, %p99
    %p101 = scmp.ne.s32.totalorder %s92, %s93
    %p102 = scmp.eq.s32.totalorder %s19, 0
    %p103 = por %p101, %p102
    %p104 = scmp.ne.s32.totalorder %s92, %s93
    %p105 = scmp.eq.s32.totalorder %s20, 1
    %p106 = por %p104, %p105
    %p108 = scmp.ne.s32.totalorder %s93, %s107
    %p109 = scmp.eq.s32.totalorder %s20, 0
    %p110 = por %p108, %p109
    %s112 = sadd.s32 %s111, 1
    %p115 = scmp.eq.s32.totalorder %s14, 1
    %p116 = scmp.ne.s32.totalorder %s111, %s113
    %p117 = scmp.eq.s32.totalorder %s14, 0
    %p118 = por %p116, %p117
    %p119 = scmp.ne.s32.totalorder %s111, %s113
    %p120 = scmp.eq.s32.totalorder %s19, 1
    %p121 = por %p119, %p120
    %p122 = scmp.ne.s32.totalorder %s113, %s114
    %p123 = scmp.eq.s32.totalorder %s19, 0
    %p124 = por %p122, %p123
    %p125 = scmp.ne.s32.totalorder %s113, %s114
    %p126 = scmp.eq.s32.totalorder %s20, 1
    %p127 = por %p125, %p126
    %p129 = scmp.ne.s32.totalorder %s114, %s128
    %p130 = scmp.eq.s32.totalorder %s20, 0
    %p131 = por %p129, %p130
    %s132 = ssub.s32 %s14, %s21
    %p133 = scmp.eq.s32.totalorder %s132, 0
    %s135 = sadd.s32 %s134, 1
    %s136 = scalar_select %p133, %s134, %s135
    %p139 = pneg %p133
    %p140 = scmp.eq.s32.totalorder %s14, 1
    %p141 = por %p139, %p140
    %p142 = scmp.ne.s32.totalorder %s134, %s137
    %p143 = scmp.eq.s32.totalorder %s14, 0
    %p144 = por %p142, %p143
    %p145 = scmp.ne.s32.totalorder %s134, %s137
    %p146 = scmp.eq.s32.totalorder %s19, 1
    %p147 = por %p145, %p146
    %p148 = scmp.ne.s32.totalorder %s137, %s138
    %p149 = scmp.eq.s32.totalorder %s19, 0
    %p150 = por %p148, %p149
    %p151 = scmp.ne.s32.totalorder %s137, %s138
    %p152 = scmp.eq.s32.totalorder %s20, 1
    %p153 = por %p151, %p152
    %p155 = scmp.ne.s32.totalorder %s138, %s154
    %p156 = scmp.eq.s32.totalorder %s20, 0
    %p157 = por %p155, %p156
    %s158 = ssub.s32 %s14, %s21
    %p159 = scmp.eq.s32.totalorder %s158, 0
    %s161 = sadd.s32 %s160, 1
    %s162 = scalar_select %p159, %s160, %s161
    %p165 = pneg %p159
    %p166 = scmp.eq.s32.totalorder %s14, 1
    %p167 = por %p165, %p166
    %p168 = scmp.ne.s32.totalorder %s160, %s163
    %p169 = scmp.eq.s32.totalorder %s14, 0
    %p170 = por %p168, %p169
    %p171 = scmp.ne.s32.totalorder %s160, %s163
    %p172 = scmp.eq.s32.totalorder %s19, 1
    %p173 = por %p171, %p172
    %p174 = scmp.ne.s32.totalorder %s163, %s164
    %p175 = scmp.eq.s32.totalorder %s19, 0
    %p176 = por %p174, %p175
    %p177 = scmp.ne.s32.totalorder %s163, %s164
    %p178 = scmp.eq.s32.totalorder %s20, 1
    %p179 = por %p177, %p178
    %p181 = scmp.ne.s32.totalorder %s164, %s180
    %p182 = scmp.eq.s32.totalorder %s20, 0
    %p183 = por %p181, %p182
    %s184 = ssub.s32 %s14, %s21
    %p185 = scmp.eq.s32.totalorder %s184, 0
    %s187 = sadd.s32 %s186, 1
    %s188 = scalar_select %p185, %s186, %s187
    %p191 = pneg %p185
    %p192 = scmp.eq.s32.totalorder %s14, 1
    %p193 = por %p191, %p192
    %p194 = scmp.ne.s32.totalorder %s186, %s189
    %p195 = scmp.eq.s32.totalorder %s14, 0
    %p196 = por %p194, %p195
    %p197 = scmp.ne.s32.totalorder %s186, %s189
    %p198 = scmp.eq.s32.totalorder %s19, 1
    %p199 = por %p197, %p198
    %p200 = scmp.ne.s32.totalorder %s189, %s190
    %p201 = scmp.eq.s32.totalorder %s19, 0
    %p202 = por %p200, %p201
    %p203 = scmp.ne.s32.totalorder %s189, %s190
    %p204 = scmp.eq.s32.totalorder %s20, 1
    %p205 = por %p203, %p204
    %p207 = scmp.ne.s32.totalorder %s190, %s206
    %p208 = scmp.eq.s32.totalorder %s20, 0
    %p209 = por %p207, %p208
    %p210 = scmp.le.s32.totalorder 1, %s14
    %p211 = scmp.lt.s32.totalorder %s14, 3
    %p212 = pnand %p210, %p211
    %p213 = pneg %p212
    // Predicated region
    $region9: #{cnn_forward.5} parent=5 // pred_check
      _
    $region10: #{cnn_forward.5} parent=5 // pred_check_branch
      %215 = sbr.rel (%p212) target = $region12
    $region11: #{cnn_forward.5} parent=5 // pred_region
      %s216 = ssub.s32 %s14, 1
      // Predicated region
      $region13: #{cnn_forward.5} parent=11 // pred_check
        %p217 = pneg %p61
      $region14: #{cnn_forward.5} parent=11 // pred_check_branch
        %219 = sbr.rel (%p217) target = $region16
      $region15: #{cnn_forward.5} parent=11 // pred_region
        _
      $region16: #{cnn_forward.5} parent=11 // pred_fallthru
        _
      // Predicated region
      $region17: #{cnn_forward.5} parent=11 // pred_check
        %p220 = pneg %p82
      $region18: #{cnn_forward.5} parent=11 // pred_check_branch
        %222 = sbr.rel (%p220) target = $region20
      $region19: #{cnn_forward.5} parent=11 // pred_region
        _
      $region20: #{cnn_forward.5} parent=11 // pred_fallthru
        _
      // Predicated region
      $region21: #{cnn_forward.5} parent=11 // pred_check
        %p223 = pneg %p103
      $region22: #{cnn_forward.5} parent=11 // pred_check_branch
        %225 = sbr.rel (%p223) target = $region24
      $region23: #{cnn_forward.5} parent=11 // pred_region
        _
      $region24: #{cnn_forward.5} parent=11 // pred_fallthru
        _
      // Predicated region
      $region25: #{cnn_forward.5} parent=11 // pred_check
        %p226 = pneg %p124
      $region26: #{cnn_forward.5} parent=11 // pred_check_branch
        %228 = sbr.rel (%p226) target = $region28
      $region27: #{cnn_forward.5} parent=11 // pred_region
        _
      $region28: #{cnn_forward.5} parent=11 // pred_fallthru
        _
    $region12: #{cnn_forward.5} parent=5 // pred_fallthru
      _
    %p229 = scmp.lt.s32.totalorder %s14, 2
    // Predicated region
    $region29: #{cnn_forward.5} parent=5 // pred_check
      %p230 = pneg %p229
    $region30: #{cnn_forward.5} parent=5 // pred_check_branch
      %232 = sbr.rel (%p230) target = $region32
    $region31: #{cnn_forward.5} parent=5 // pred_region
      // Predicated region
      $region33: #{cnn_forward.5} parent=31 // pred_check
        %p233 = pneg %p34
      $region34: #{cnn_forward.5} parent=31 // pred_check_branch
        %235 = sbr.rel (%p233) target = $region36
      $region35: #{cnn_forward.5} parent=31 // pred_region
        %s236 = smul.u32 2, %s14
        %p237 = scmp.lt.s32.totalorder %s236, 3
        %s238 = scalar_select %p237, %s236, 3
        %s239 = smul.addr %s238, 4
        %s240 = smul.addr %s239, 4
        %s241 = scalar_lea.vmem %s0, %s240
        %s242 = smul.u32 2, %s14
      $region36: #{cnn_forward.5} parent=31 // pred_fallthru
        _
    $region32: #{cnn_forward.5} parent=5 // pred_fallthru
      _
    %p243 = scmp.le.s32.totalorder 1, %s14
    %p244 = scmp.lt.s32.totalorder %s14, 3
    %p245 = pnand %p243, %p244
    %p246 = pneg %p245
    // Predicated region
    $region37: #{cnn_forward.5} parent=5 // pred_check
      _
    $region38: #{cnn_forward.5} parent=5 // pred_check_branch
      %248 = sbr.rel (%p245) target = $region40
    $region39: #{cnn_forward.5} parent=5 // pred_region
      %s249 = ssub.s32 %s14, 1
      %s250 = smul.u32 2, %s19
      %p251 = scmp.lt.s32.totalorder %s250, 3
      %s252 = scalar_select %p251, %s250, 3
      %s253 = smul.addr %s252, 4
      %s254 = smul.addr %s253, 4
      %s255 = scalar_lea.vmem %s0, %s254
      %p256 = pneg %p40
      %p257 = pneg %p37
      %p258 = pneg %p61
      %p259 = pneg %p58
      %p260 = pneg %p82
      %p261 = pneg %p79
      %p262 = pneg %p103
      %p263 = pneg %p100
      %p264 = pneg %p124
      %p265 = pneg %p121
      %p266 = pneg %p150
      %p267 = pneg %p147
      %s268 = smul.u32 2, %s19
      %p269 = scmp.lt.s32.totalorder %s268, 3
      %s270 = scalar_select %p269, %s268, 3
      %s271 = smul.addr %s270, 4
      %s272 = scalar_lea.vmem %s5, %s271
      %p273 = pneg %p176
      %p274 = pneg %p173
      %p275 = scmp.lt.s32.totalorder %s19, 1
      %s276 = scalar_select %p275, %s19, 1
      %s277 = scalar_lea.vmem %s6, %s276
      %p278 = pneg %p202
      %p279 = pneg %p199
      %p280 = scmp.lt.s32.totalorder %s19, 1
      %s281 = scalar_select %p280, %s19, 1
      %s282 = scalar_lea.vmem %s7, %s281
      %s283 = smul.u32 2, %s19
      %p284 = scmp.lt.s32.totalorder %s283, 3
      %s285 = scalar_select %p284, %s283, 3
      %s286 = smul.addr %s285, 4
      %s287 = smul.addr %s286, 4
      %s288 = scalar_lea.vmem %s0, %s287
      %s289 = smul.u32 2, %s19
      %s290 = smul.u32 2, %s19
      %p291 = scmp.lt.s32.totalorder %s290, 3
      %s292 = scalar_select %p291, %s290, 3
      %s293 = smul.addr %s292, 4
      %s294 = scalar_lea.vmem %s5, %s293
      %s295 = smul.u32 2, %s19
      %p296 = scmp.lt.s32.totalorder %s19, 1
      %s297 = scalar_select %p296, %s19, 1
      %s298 = scalar_lea.vmem %s6, %s297
      %p299 = scmp.lt.s32.totalorder %s19, 1
      %s300 = scalar_select %p299, %s19, 1
      %s301 = scalar_lea.vmem %s7, %s300
      %v303 = vld [vmem:[%s288] sm:$0xff]
      %v304 = vld [vmem:[%s288 + $0x8] sm:$0xff]
      %v305 = vld [vmem:[%s288 + $0x10] sm:$0xff]
      %v306 = vld [vmem:[%s288 + $0x18] sm:$0xff]
      %v307 = vunpack.c.l.bf16 %v303
      %v308 = vunpack.c.h.bf16 %v303
      %v309 = vunpack.c.l.bf16 %v304
      %v310 = vunpack.c.h.bf16 %v304
      %v311 = vunpack.c.l.bf16 %v305
      %v312 = vunpack.c.h.bf16 %v305
      %v313 = vunpack.c.l.bf16 %v306
      %v314 = vunpack.c.h.bf16 %v306
      %v315 = vld [vmem:[%s1] sm:$0xf]
      %v317 = vlaneseq
      %v318 = vshrl.u32 %v317, 7
      %v319 = vsub.s32 0, %v318
      %v320 = vrot.slane %v315, %v319
      %v321 = vlaneseq
      %v322 = vshrl.u32 %v321, 7
      %v323 = vsub.s32 1, %v322
      %v324 = vrot.slane %v315, %v323
      %v325 = vlaneseq
      %v326 = vshrl.u32 %v325, 7
      %v327 = vsub.s32 2, %v326
      %v328 = vrot.slane %v315, %v327
      %v329 = vlaneseq
      %v330 = vshrl.u32 %v329, 7
      %v331 = vsub.s32 3, %v330
      %v332 = vrot.slane %v315, %v331
      %v337 = vmul.f32 %v307, %v320
      %v338 = vmul.f32 %v308, %v324
      %v339 = vmul.f32 %v309, %v328
      %v340 = vmul.f32 %v310, %v332
      %v341 = vmul.f32 %v311, %v320
      %v342 = vmul.f32 %v312, %v324
      %v343 = vmul.f32 %v313, %v328
      %v344 = vmul.f32 %v314, %v332
      %v345 = vld [vmem:[%s2] sm:$0xf]
      %v347 = vlaneseq
      %v348 = vshrl.u32 %v347, 7
      %v349 = vsub.s32 0, %v348
      %v350 = vrot.slane %v345, %v349
      %v351 = vlaneseq
      %v352 = vshrl.u32 %v351, 7
      %v353 = vsub.s32 1, %v352
      %v354 = vrot.slane %v345, %v353
      %v355 = vlaneseq
      %v356 = vshrl.u32 %v355, 7
      %v357 = vsub.s32 2, %v356
      %v358 = vrot.slane %v345, %v357
      %v359 = vlaneseq
      %v360 = vshrl.u32 %v359, 7
      %v361 = vsub.s32 3, %v360
      %v362 = vrot.slane %v345, %v361
      %v367 = vadd.f32 %v337, %v350
      %v368 = vadd.f32 %v338, %v354
      %v369 = vadd.f32 %v339, %v358
      %v370 = vadd.f32 %v340, %v362
      %v371 = vadd.f32 %v341, %v350
      %v372 = vadd.f32 %v342, %v354
      %v373 = vadd.f32 %v343, %v358
      %v374 = vadd.f32 %v344, %v362
      %v375 = vmax.f32 %v367, 0.0
      %v376 = vmax.f32 %v368, 0.0
      %v377 = vmax.f32 %v369, 0.0
      %v378 = vmax.f32 %v370, 0.0
      %v379 = vmax.f32 %v371, 0.0
      %v380 = vmax.f32 %v372, 0.0
      %v381 = vmax.f32 %v373, 0.0
      %v382 = vmax.f32 %v374, 0.0
      %v383 = vpack.c.bf16 %v379, %v375
      %v384 = vpack.c.bf16 %v380, %v376
      %v385 = vpack.c.bf16 %v381, %v377
      %v386 = vpack.c.bf16 %v382, %v378
      %v387 = vld [vmem:[%s3] sm:$0xf]
      %v388 = vld [vmem:[%s3 + $0x4] sm:$0xf]
      %v389 = vld [vmem:[%s3 + $0x8] sm:$0xf]
      %v390 = vld [vmem:[%s3 + $0xc] sm:$0xf]
      %v391 = vld [vmem:[%s3 + $0x10] sm:$0xf]
      %v392 = vld [vmem:[%s3 + $0x14] sm:$0xf]
      %v393 = vld [vmem:[%s3 + $0x18] sm:$0xf]
      %v394 = vld [vmem:[%s3 + $0x1c] sm:$0xf]
      %v395 = vld [vmem:[%s3 + $0x20] sm:$0xf]
      %v396 = vld [vmem:[%s3 + $0x24] sm:$0xf]
      %v397 = vld [vmem:[%s3 + $0x28] sm:$0xf]
      %v398 = vld [vmem:[%s3 + $0x2c] sm:$0xf]
      %v399 = vld [vmem:[%s3 + $0x30] sm:$0xf]
      %v400 = vld [vmem:[%s3 + $0x34] sm:$0xf]
      %v401 = vld [vmem:[%s3 + $0x38] sm:$0xf]
      %v402 = vld [vmem:[%s3 + $0x3c] sm:$0xf]
      %v403 = vld [vmem:[%s3 + $0x40] sm:$0xf]
      %v404 = vld [vmem:[%s3 + $0x44] sm:$0xf]
      %v405 = vld [vmem:[%s3 + $0x48] sm:$0xf]
      %v406 = vld [vmem:[%s3 + $0x4c] sm:$0xf]
      %v407 = vld [vmem:[%s3 + $0x50] sm:$0xf]
      %v408 = vld [vmem:[%s3 + $0x54] sm:$0xf]
      %v409 = vld [vmem:[%s3 + $0x58] sm:$0xf]
      %v410 = vld [vmem:[%s3 + $0x5c] sm:$0xf]
      %v411 = vld [vmem:[%s3 + $0x60] sm:$0xf]
      %v412 = vld [vmem:[%s3 + $0x64] sm:$0xf]
      %v413 = vld [vmem:[%s3 + $0x68] sm:$0xf]
      %v414 = vld [vmem:[%s3 + $0x6c] sm:$0xf]
      %v415 = vld [vmem:[%s3 + $0x70] sm:$0xf]
      %v416 = vld [vmem:[%s3 + $0x74] sm:$0xf]
      %v417 = vld [vmem:[%s3 + $0x78] sm:$0xf]
      %v418 = vld [vmem:[%s3 + $0x7c] sm:$0xf]
      %v419 = vld [vmem:[%s3 + $0x80] sm:$0xf]
      %v420 = vld [vmem:[%s3 + $0x84] sm:$0xf]
      %v421 = vld [vmem:[%s3 + $0x88] sm:$0xf]
      %v422 = vld [vmem:[%s3 + $0x8c] sm:$0xf]
      %v423 = vld [vmem:[%s3 + $0x90] sm:$0xf]
      %v424 = vld [vmem:[%s3 + $0x94] sm:$0xf]
      %v425 = vld [vmem:[%s3 + $0x98] sm:$0xf]
      %v426 = vld [vmem:[%s3 + $0x9c] sm:$0xf]
      %v427 = vld [vmem:[%s3 + $0xa0] sm:$0xf]
      %v428 = vld [vmem:[%s3 + $0xa4] sm:$0xf]
      %v429 = vld [vmem:[%s3 + $0xa8] sm:$0xf]
      %v430 = vld [vmem:[%s3 + $0xac] sm:$0xf]
      %v431 = vld [vmem:[%s3 + $0xb0] sm:$0xf]
      %v432 = vld [vmem:[%s3 + $0xb4] sm:$0xf]
      %v433 = vld [vmem:[%s3 + $0xb8] sm:$0xf]
      %v434 = vld [vmem:[%s3 + $0xbc] sm:$0xf]
      %v435 = vld [vmem:[%s3 + $0xc0] sm:$0xf]
      %v436 = vld [vmem:[%s3 + $0xc4] sm:$0xf]
      %v437 = vld [vmem:[%s3 + $0xc8] sm:$0xf]
      %v438 = vld [vmem:[%s3 + $0xcc] sm:$0xf]
      %v439 = vld [vmem:[%s3 + $0xd0] sm:$0xf]
      %v440 = vld [vmem:[%s3 + $0xd4] sm:$0xf]
      %v441 = vld [vmem:[%s3 + $0xd8] sm:$0xf]
      %v442 = vld [vmem:[%s3 + $0xdc] sm:$0xf]
      %v443 = vld [vmem:[%s3 + $0xe0] sm:$0xf]
      %v444 = vld [vmem:[%s3 + $0xe4] sm:$0xf]
      %v445 = vld [vmem:[%s3 + $0xe8] sm:$0xf]
      %v446 = vld [vmem:[%s3 + $0xec] sm:$0xf]
      %v447 = vld [vmem:[%s3 + $0xf0] sm:$0xf]
      %v448 = vld [vmem:[%s3 + $0xf4] sm:$0xf]
      %v449 = vld [vmem:[%s3 + $0xf8] sm:$0xf]
      %v450 = vld [vmem:[%s3 + $0xfc] sm:$0xf]
      %v451 = vld [vmem:[%s4] sm:$0x1]
      %v453 = vlaneseq
      %v454 = vshrl.u32 %v453, 7
      %v455 = vsub.s32 0, %v454
      %v456 = vrot.slane %v451, %v455
      %v522 = vunpack.c.l.b16 %v387
      %v523 = vunpack.c.l.b16 %v388
      %v524 = vunpack.c.l.b16 %v389
      %v525 = vunpack.c.l.b16 %v390
      %v526 = vunpack.c.l.b16 %v391
      %v527 = vunpack.c.l.b16 %v392
      %v528 = vunpack.c.l.b16 %v393
      %v529 = vunpack.c.l.b16 %v394
      %v530 = vunpack.c.l.b16 %v395
      %v531 = vunpack.c.l.b16 %v396
      %v532 = vunpack.c.l.b16 %v397
      %v533 = vunpack.c.l.b16 %v398
      %v534 = vunpack.c.l.b16 %v399
      %v535 = vunpack.c.l.b16 %v400
      %v536 = vunpack.c.l.b16 %v401
      %v537 = vunpack.c.l.b16 %v402
      %v538 = vunpack.c.l.b16 %v403
      %v539 = vunpack.c.l.b16 %v404
      %v540 = vunpack.c.l.b16 %v405
      %v541 = vunpack.c.l.b16 %v406
      %v542 = vunpack.c.l.b16 %v407
      %v543 = vunpack.c.l.b16 %v408
      %v544 = vunpack.c.l.b16 %v409
      %v545 = vunpack.c.l.b16 %v410
      %v546 = vunpack.c.l.b16 %v411
      %v547 = vunpack.c.l.b16 %v412
      %v548 = vunpack.c.l.b16 %v413
      %v549 = vunpack.c.l.b16 %v414
      %v550 = vunpack.c.l.b16 %v415
      %v551 = vunpack.c.l.b16 %v416
      %v552 = vunpack.c.l.b16 %v417
      %v553 = vunpack.c.l.b16 %v418
      %v554 = vunpack.c.l.b16 %v419
      %v555 = vunpack.c.l.b16 %v420
      %v556 = vunpack.c.l.b16 %v421
      %v557 = vunpack.c.l.b16 %v422
      %v558 = vunpack.c.l.b16 %v423
      %v559 = vunpack.c.l.b16 %v424
      %v560 = vunpack.c.l.b16 %v425
      %v561 = vunpack.c.l.b16 %v426
      %v562 = vunpack.c.l.b16 %v427
      %v563 = vunpack.c.l.b16 %v428
      %v564 = vunpack.c.l.b16 %v429
      %v565 = vunpack.c.l.b16 %v430
      %v566 = vunpack.c.l.b16 %v431
      %v567 = vunpack.c.l.b16 %v432
      %v568 = vunpack.c.l.b16 %v433
      %v569 = vunpack.c.l.b16 %v434
      %v570 = vunpack.c.l.b16 %v435
      %v571 = vunpack.c.l.b16 %v436
      %v572 = vunpack.c.l.b16 %v437
      %v573 = vunpack.c.l.b16 %v438
      %v574 = vunpack.c.l.b16 %v439
      %v575 = vunpack.c.l.b16 %v440
      %v576 = vunpack.c.l.b16 %v441
      %v577 = vunpack.c.l.b16 %v442
      %v578 = vunpack.c.l.b16 %v443
      %v579 = vunpack.c.l.b16 %v444
      %v580 = vunpack.c.l.b16 %v445
      %v581 = vunpack.c.l.b16 %v446
      %v582 = vunpack.c.l.b16 %v447
      %v583 = vunpack.c.l.b16 %v448
      %v584 = vunpack.c.l.b16 %v449
      %v585 = vunpack.c.l.b16 %v450
      %v586 = vpack.c.b16 %v523, %v522
      %v587 = vpack.c.b16 %v525, %v524
      %v588 = vpack.c.b16 %v527, %v526
      %v589 = vpack.c.b16 %v529, %v528
      %v590 = vpack.c.b16 %v531, %v530
      %v591 = vpack.c.b16 %v533, %v532
      %v592 = vpack.c.b16 %v535, %v534
      %v593 = vpack.c.b16 %v537, %v536
      %v594 = vpack.c.b16 %v539, %v538
      %v595 = vpack.c.b16 %v541, %v540
      %v596 = vpack.c.b16 %v543, %v542
      %v597 = vpack.c.b16 %v545, %v544
      %v598 = vpack.c.b16 %v547, %v546
      %v599 = vpack.c.b16 %v549, %v548
      %v600 = vpack.c.b16 %v551, %v550
      %v601 = vpack.c.b16 %v553, %v552
      %v602 = vpack.c.b16 %v555, %v554
      %v603 = vpack.c.b16 %v557, %v556
      %v604 = vpack.c.b16 %v559, %v558
      %v605 = vpack.c.b16 %v561, %v560
      %v606 = vpack.c.b16 %v563, %v562
      %v607 = vpack.c.b16 %v565, %v564
      %v608 = vpack.c.b16 %v567, %v566
      %v609 = vpack.c.b16 %v569, %v568
      %v610 = vpack.c.b16 %v571, %v570
      %v611 = vpack.c.b16 %v573, %v572
      %v612 = vpack.c.b16 %v575, %v574
      %v613 = vpack.c.b16 %v577, %v576
      %v614 = vpack.c.b16 %v579, %v578
      %v615 = vpack.c.b16 %v581, %v580
      %v616 = vpack.c.b16 %v583, %v582
      %v617 = vpack.c.b16 %v585, %v584
      %650 = vmatprep.subr.bf16.mxu0 0
      %651 = vmatpush1.bf16.msra.mxu0 %v593
      %652 = vmatprep.subr.bf16.mxu0 0
      %653 = vmatpush1.bf16.msra.mxu0 %v592
      %654 = vmatprep.subr.bf16.mxu0 0
      %655 = vmatpush1.bf16.msra.mxu0 %v591
      %656 = vmatprep.subr.bf16.mxu0 0
      %657 = vmatpush1.bf16.msra.mxu0 %v590
      %658 = vmatprep.subr.bf16.mxu0 0
      %659 = vmatpush1.bf16.msra.mxu0 %v589
      %660 = vmatprep.subr.bf16.mxu0 0
      %661 = vmatpush1.bf16.msra.mxu0 %v588
      %662 = vmatprep.subr.bf16.mxu0 0
      %663 = vmatpush1.bf16.msra.mxu0 %v587
      %664 = vmatprep.subr.bf16.mxu0 0
      %665 = vmatpush1.bf16.msra.mxu0 %v586
      %666 = vmatprep.subr.bf16.mxu0 0
      %667 = vmatpush2.bf16.msra.mxu0 %v601
      %668 = vmatprep.subr.bf16.mxu0 0
      %669 = vmatpush2.bf16.msra.mxu0 %v600
      %670 = vmatprep.subr.bf16.mxu0 0
      %671 = vmatpush2.bf16.msra.mxu0 %v599
      %672 = vmatprep.subr.bf16.mxu0 0
      %673 = vmatpush2.bf16.msra.mxu0 %v598
      %674 = vmatprep.subr.bf16.mxu0 0
      %675 = vmatpush2.bf16.msra.mxu0 %v597
      %676 = vmatprep.subr.bf16.mxu0 0
      %677 = vmatpush2.bf16.msra.mxu0 %v596
      %678 = vmatprep.subr.bf16.mxu0 0
      %679 = vmatpush2.bf16.msra.mxu0 %v595
      %680 = vmatprep.subr.bf16.mxu0 0
      %681 = vmatpush2.bf16.msra.mxu0 %v594
      %682 = vmatprep.mubr.bf16.mxu0 %v384
      %683 = vmatmul.mubr.bf16.gmra.mxu0 %v383
      %v684 = vpop.f32.mrf.mxu0
      %v685 = vadd.f32 %v456, %v684
      %v686 = vpop.f32.mrf.mxu0
      %v687 = vpop.f32.mrf.mxu0
      %v688 = vadd.f32 %v456, %v687
      %v689 = vpop.f32.mrf.mxu0
      %690 = vdwg.mxu0
      %691 = vmatprep.subr.bf16.mxu0 0
      %692 = vmatpush1.bf16.msra.mxu0 %v609
      %693 = vmatprep.subr.bf16.mxu0 0
      %694 = vmatpush1.bf16.msra.mxu0 %v608
      %695 = vmatprep.subr.bf16.mxu0 0
      %696 = vmatpush1.bf16.msra.mxu0 %v607
      %697 = vmatprep.subr.bf16.mxu0 0
      %698 = vmatpush1.bf16.msra.mxu0 %v606
      %699 = vmatprep.subr.bf16.mxu0 0
      %700 = vmatpush1.bf16.msra.mxu0 %v605
      %701 = vmatprep.subr.bf16.mxu0 0
      %702 = vmatpush1.bf16.msra.mxu0 %v604
      %703 = vmatprep.subr.bf16.mxu0 0
      %704 = vmatpush1.bf16.msra.mxu0 %v603
      %705 = vmatprep.subr.bf16.mxu0 0
      %706 = vmatpush1.bf16.msra.mxu0 %v602
      %707 = vmatprep.subr.bf16.mxu0 0
      %708 = vmatpush2.bf16.msra.mxu0 %v617
      %709 = vmatprep.subr.bf16.mxu0 0
      %710 = vmatpush2.bf16.msra.mxu0 %v616
      %711 = vmatprep.subr.bf16.mxu0 0
      %712 = vmatpush2.bf16.msra.mxu0 %v615
      %713 = vmatprep.subr.bf16.mxu0 0
      %714 = vmatpush2.bf16.msra.mxu0 %v614
      %715 = vmatprep.subr.bf16.mxu0 0
      %716 = vmatpush2.bf16.msra.mxu0 %v613
      %717 = vmatprep.subr.bf16.mxu0 0
      %718 = vmatpush2.bf16.msra.mxu0 %v612
      %719 = vmatprep.subr.bf16.mxu0 0
      %720 = vmatpush2.bf16.msra.mxu0 %v611
      %721 = vmatprep.subr.bf16.mxu0 0
      %722 = vmatpush2.bf16.msra.mxu0 %v610
      %723 = vmatprep.mubr.bf16.mxu0 %v386
      %724 = vmatmul.mubr.bf16.gmra.mxu0 %v385
      %v725 = vpop.f32.mrf.mxu0
      %v726 = vadd.f32 %v685, %v725
      %v727 = vpop.f32.mrf.mxu0
      %v728 = vpop.f32.mrf.mxu0
      %v729 = vadd.f32 %v688, %v728
      %v730 = vpop.f32.mrf.mxu0
      %731 = vdwg.mxu0
      %v732 = vpack.c.bf16 %v729, %v726
      %v734 = vunpack.c.l.b16 %v732
      %v735 = vunpack.c.h.b16 %v732
      %v736 = vpack.c.b16 %v734, %v734
      %v737 = vpack.c.b16 %v735, %v735
      %740 = vst [vmem:[%s294] sm:$0xf] %v736
      %741 = vst [vmem:[%s294 + $0x4] sm:$0xf] %v737
      %v742 = vadd.f32 %v726, %v729
      %v743 = vrot.slane %v742, 4
      %v744 = vadd.f32 %v742, %v743
      %v745 = vrot.slane %v744, 2
      %v746 = vadd.f32 %v744, %v745
      %v747 = vrot.slane %v746, 1
      %v748 = vadd.f32 %v746, %v747
      %v749 = vmul.f32 %v748, 0.0625
      %v750 = vsub.f32 %v726, %v749
      %v751 = vsub.f32 %v729, %v749
      %752 = vst [vmem:[%s298] sm:$0x1] %v748
      %v753 = vmul.f32 %v750, %v750
      %v754 = vmul.f32 %v751, %v751
      %v755 = vadd.f32 %v753, %v754
      %v756 = vrot.slane %v755, 4
      %v757 = vadd.f32 %v755, %v756
      %v758 = vrot.slane %v757, 2
      %v759 = vadd.f32 %v757, %v758
      %v760 = vrot.slane %v759, 1
      %v761 = vadd.f32 %v759, %v760
      %762 = vst [vmem:[%s301] sm:$0x1] %v761
      %s763 = smul.u32 2, %s19
      %p764 = scmp.lt.s32.totalorder %s763, 3
      %s765 = scalar_select %p764, %s763, 3
      %s766 = smul.addr %s765, 4
      %s767 = scalar_lea.vmem %s5, %s766
      %p768 = scmp.lt.s32.totalorder %s19, 1
      %s769 = scalar_select %p768, %s19, 1
      %s770 = scalar_lea.vmem %s6, %s769
      %p771 = scmp.lt.s32.totalorder %s19, 1
      %s772 = scalar_select %p771, %s19, 1
      %s773 = scalar_lea.vmem %s7, %s772
      // Predicated region
      $region41: #{cnn_forward.5} parent=39 // pred_check
        %p774 = pneg %p147
      $region42: #{cnn_forward.5} parent=39 // pred_check_branch
        %776 = sbr.rel (%p774) target = $region44
      $region43: #{cnn_forward.5} parent=39 // pred_region
        %s777 = smul.u32 2, %s19
      $region44: #{cnn_forward.5} parent=39 // pred_fallthru
        _
      // Predicated region
      $region45: #{cnn_forward.5} parent=39 // pred_check
        %p778 = pneg %p173
      $region46: #{cnn_forward.5} parent=39 // pred_check_branch
        %780 = sbr.rel (%p778) target = $region48
      $region47: #{cnn_forward.5} parent=39 // pred_region
        _
      $region48: #{cnn_forward.5} parent=39 // pred_fallthru
        _
      // Predicated region
      $region49: #{cnn_forward.5} parent=39 // pred_check
        %p781 = pneg %p199
      $region50: #{cnn_forward.5} parent=39 // pred_check_branch
        %783 = sbr.rel (%p781) target = $region52
      $region51: #{cnn_forward.5} parent=39 // pred_region
        _
      $region52: #{cnn_forward.5} parent=39 // pred_fallthru
        _
    $region40: #{cnn_forward.5} parent=5 // pred_fallthru
      _
    %p784 = scmp.le.s32.totalorder 2, %s14
    // Predicated region
    $region53: #{cnn_forward.5} parent=5 // pred_check
      %p785 = pneg %p784
    $region54: #{cnn_forward.5} parent=5 // pred_check_branch
      %787 = sbr.rel (%p785) target = $region56
    $region55: #{cnn_forward.5} parent=5 // pred_region
      %s788 = ssub.s32 %s14, 2
      // Predicated region
      $region57: #{cnn_forward.5} parent=55 // pred_check
        %p789 = pneg %p153
      $region58: #{cnn_forward.5} parent=55 // pred_check_branch
        %791 = sbr.rel (%p789) target = $region60
      $region59: #{cnn_forward.5} parent=55 // pred_region
        %s792 = smul.u32 2, %s20
        %p793 = scmp.lt.s32.totalorder %s792, 3
        %s794 = scalar_select %p793, %s792, 3
        %s795 = smul.addr %s794, 4
        %s796 = scalar_lea.vmem %s5, %s795
      $region60: #{cnn_forward.5} parent=55 // pred_fallthru
        _
      // Predicated region
      $region61: #{cnn_forward.5} parent=55 // pred_check
        %p797 = pneg %p179
      $region62: #{cnn_forward.5} parent=55 // pred_check_branch
        %799 = sbr.rel (%p797) target = $region64
      $region63: #{cnn_forward.5} parent=55 // pred_region
        %p800 = scmp.lt.s32.totalorder %s20, 1
        %s801 = scalar_select %p800, %s20, 1
        %s802 = scalar_lea.vmem %s6, %s801
      $region64: #{cnn_forward.5} parent=55 // pred_fallthru
        _
      // Predicated region
      $region65: #{cnn_forward.5} parent=55 // pred_check
        %p803 = pneg %p205
      $region66: #{cnn_forward.5} parent=55 // pred_check_branch
        %805 = sbr.rel (%p803) target = $region68
      $region67: #{cnn_forward.5} parent=55 // pred_region
        %p806 = scmp.lt.s32.totalorder %s20, 1
        %s807 = scalar_select %p806, %s20, 1
        %s808 = scalar_lea.vmem %s7, %s807
      $region68: #{cnn_forward.5} parent=55 // pred_fallthru
        _
    $region56: #{cnn_forward.5} parent=5 // pred_fallthru
      _
  $region6: #{cnn_forward.5} parent=0 // loop_footer
    %s18 = sadd.s32 1, %s14
  $region7: #{cnn_forward.5} parent=0 // loop_footer_branch
    %13 = sbr.rel target = $region3
  $region8: #{cnn_forward.5} parent=0 // loop_exit
    _

// kernel: cnn_forward.7
$region0: #{cnn_forward.7}
  #allocation0 [shape = 'u32[]', space=smem, size = 0x4, offset = 0x4, fixed_abs, tag = 'smem constant byte address 0x4 - core index']
  #allocation1 [shape = 'u32[144,128]{1,0:T(1,128)}', space=vmem, size = 0x12000, scoped, tag = 'internal scratch']
  %s0 = inlined_call_operand.vmem [shape: bf16[8,4,128], index: 0, kind: input, shape index: {}]
  %s1 = inlined_call_operand.vmem [shape: f32[1,128], index: 1, kind: input, shape index: {}]
  %s2 = inlined_call_operand.vmem [shape: f32[1,128], index: 2, kind: input, shape index: {}]
  %s3 = inlined_call_operand.vmem [shape: f32[128,128], index: 3, kind: input, shape index: {}]
  %s4 = inlined_call_operand.vmem [shape: f32[1,128], index: 4, kind: input, shape index: {}]
  %s5 = inlined_call_operand.vmem [shape: f32[8,128], index: 5, kind: output, shape index: {}]
  %s6 = sld [smem:[#allocation0]]
  $region30: #{cnn_forward.7} parent=0
    _
  %s8 = ssub.s32 1, %s6
  %s9 = scalar_select 0, %s8, %s6
  // Predicated region
  $region2: #{cnn_forward.7} parent=0 // pred_check
    _
  $region3: #{cnn_forward.7} parent=0 // pred_check_branch
    %11 = sbr.rel (0) target = $region5
  $region4: #{cnn_forward.7} parent=0 // pred_region
    _
  $region5: #{cnn_forward.7} parent=0 // pred_fallthru
    _
  // Predicated region
  $region6: #{cnn_forward.7} parent=0 // pred_check
    _
  $region7: #{cnn_forward.7} parent=0 // pred_check_branch
    %13 = sbr.rel (0) target = $region9
  $region8: #{cnn_forward.7} parent=0 // pred_region
    _
  $region9: #{cnn_forward.7} parent=0 // pred_fallthru
    _
  // Predicated region
  $region10: #{cnn_forward.7} parent=0 // pred_check
    _
  $region11: #{cnn_forward.7} parent=0 // pred_check_branch
    %15 = sbr.rel (0) target = $region13
  $region12: #{cnn_forward.7} parent=0 // pred_region
    _
  $region13: #{cnn_forward.7} parent=0 // pred_fallthru
    _
  // Predicated region
  $region14: #{cnn_forward.7} parent=0 // pred_check
    _
  $region15: #{cnn_forward.7} parent=0 // pred_check_branch
    %17 = sbr.rel (0) target = $region17
  $region16: #{cnn_forward.7} parent=0 // pred_region
    _
  $region17: #{cnn_forward.7} parent=0 // pred_fallthru
    _
  // Predicated region
  $region18: #{cnn_forward.7} parent=0 // pred_check
    _
  $region19: #{cnn_forward.7} parent=0 // pred_check_branch
    %19 = sbr.rel (0) target = $region21
  $region20: #{cnn_forward.7} parent=0 // pred_region
    _
  $region21: #{cnn_forward.7} parent=0 // pred_fallthru
    _
  %v20 = vld [vmem:[%s0] sm:$0x3]
  %v21 = vld [vmem:[%s0 + $0x2] sm:$0x3]
  %v22 = vld [vmem:[%s0 + $0x4] sm:$0x3]
  %v23 = vld [vmem:[%s0 + $0x6] sm:$0x3]
  %v24 = vld [vmem:[%s0 + $0x8] sm:$0x3]
  %v25 = vld [vmem:[%s0 + $0xa] sm:$0x3]
  %v26 = vld [vmem:[%s0 + $0xc] sm:$0x3]
  %v27 = vld [vmem:[%s0 + $0xe] sm:$0x3]
  %v28 = vunpack.c.l.bf16 %v20
  %v29 = vunpack.c.l.bf16 %v21
  %v30 = vunpack.c.l.bf16 %v22
  %v31 = vunpack.c.l.bf16 %v23
  %v32 = vunpack.c.l.bf16 %v24
  %v33 = vunpack.c.l.bf16 %v25
  %v34 = vunpack.c.l.bf16 %v26
  %v35 = vunpack.c.l.bf16 %v27
  %v36 = vld [vmem:[%s1] sm:$0x1]
  %v38 = vlaneseq
  %v39 = vshrl.u32 %v38, 7
  %v40 = vsub.s32 0, %v39
  %v41 = vrot.slane %v36, %v40
  %v43 = vmul.f32 %v28, %v41
  %v44 = vmul.f32 %v29, %v41
  %v45 = vmul.f32 %v30, %v41
  %v46 = vmul.f32 %v31, %v41
  %v47 = vmul.f32 %v32, %v41
  %v48 = vmul.f32 %v33, %v41
  %v49 = vmul.f32 %v34, %v41
  %v50 = vmul.f32 %v35, %v41
  %v51 = vld [vmem:[%s2] sm:$0x1]
  %v53 = vlaneseq
  %v54 = vshrl.u32 %v53, 7
  %v55 = vsub.s32 0, %v54
  %v56 = vrot.slane %v51, %v55
  %v58 = vadd.f32 %v43, %v56
  %v59 = vadd.f32 %v44, %v56
  %v60 = vadd.f32 %v45, %v56
  %v61 = vadd.f32 %v46, %v56
  %v62 = vadd.f32 %v47, %v56
  %v63 = vadd.f32 %v48, %v56
  %v64 = vadd.f32 %v49, %v56
  %v65 = vadd.f32 %v50, %v56
  %v66 = vmax.f32 %v58, 0.0
  %v67 = vmax.f32 %v59, 0.0
  %v68 = vmax.f32 %v60, 0.0
  %v69 = vmax.f32 %v61, 0.0
  %v70 = vmax.f32 %v62, 0.0
  %v71 = vmax.f32 %v63, 0.0
  %v72 = vmax.f32 %v64, 0.0
  %v73 = vmax.f32 %v65, 0.0
  %vm74 = vcmask 1043456
  %v75 = vsel %vm74, %v66, 0.0
  %v76 = vrot.slane %v75, 4
  %v77 = vadd.f32 %v75, %v76
  %v78 = vrot.slane %v77, 2
  %v79 = vadd.f32 %v77, %v78
  %v80 = vrot.slane %v79, 1
  %v81 = vadd.f32 %v79, %v80
  %v82 = vsel %vm74, %v67, 0.0
  %v83 = vrot.slane %v82, 4
  %v84 = vadd.f32 %v82, %v83
  %v85 = vrot.slane %v84, 2
  %v86 = vadd.f32 %v84, %v85
  %v87 = vrot.slane %v86, 1
  %v88 = vadd.f32 %v86, %v87
  %v89 = vsel %vm74, %v68, 0.0
  %v90 = vrot.slane %v89, 4
  %v91 = vadd.f32 %v89, %v90
  %v92 = vrot.slane %v91, 2
  %v93 = vadd.f32 %v91, %v92
  %v94 = vrot.slane %v93, 1
  %v95 = vadd.f32 %v93, %v94
  %v96 = vsel %vm74, %v69, 0.0
  %v97 = vrot.slane %v96, 4
  %v98 = vadd.f32 %v96, %v97
  %v99 = vrot.slane %v98, 2
  %v100 = vadd.f32 %v98, %v99
  %v101 = vrot.slane %v100, 1
  %v102 = vadd.f32 %v100, %v101
  %v103 = vsel %vm74, %v70, 0.0
  %v104 = vrot.slane %v103, 4
  %v105 = vadd.f32 %v103, %v104
  %v106 = vrot.slane %v105, 2
  %v107 = vadd.f32 %v105, %v106
  %v108 = vrot.slane %v107, 1
  %v109 = vadd.f32 %v107, %v108
  %v110 = vsel %vm74, %v71, 0.0
  %v111 = vrot.slane %v110, 4
  %v112 = vadd.f32 %v110, %v111
  %v113 = vrot.slane %v112, 2
  %v114 = vadd.f32 %v112, %v113
  %v115 = vrot.slane %v114, 1
  %v116 = vadd.f32 %v114, %v115
  %v117 = vsel %vm74, %v72, 0.0
  %v118 = vrot.slane %v117, 4
  %v119 = vadd.f32 %v117, %v118
  %v120 = vrot.slane %v119, 2
  %v121 = vadd.f32 %v119, %v120
  %v122 = vrot.slane %v121, 1
  %v123 = vadd.f32 %v121, %v122
  %v124 = vsel %vm74, %v73, 0.0
  %v125 = vrot.slane %v124, 4
  %v126 = vadd.f32 %v124, %v125
  %v127 = vrot.slane %v126, 2
  %v128 = vadd.f32 %v126, %v127
  %v129 = vrot.slane %v128, 1
  %v130 = vadd.f32 %v128, %v129
  %v131 = vrcp.pop 4.0
  %v132 = vmul.f32 %v81, %v131
  %v133 = vmul.f32 %v88, %v131
  %v134 = vmul.f32 %v95, %v131
  %v135 = vmul.f32 %v102, %v131
  %v136 = vmul.f32 %v109, %v131
  %v137 = vmul.f32 %v116, %v131
  %v138 = vmul.f32 %v123, %v131
  %v139 = vmul.f32 %v130, %v131
  %v140 = vld [vmem:[%s3] sm:$0xff]
  %v141 = vld [vmem:[%s3 + $0x8] sm:$0xff]
  %v142 = vld [vmem:[%s3 + $0x10] sm:$0xff]
  %v143 = vld [vmem:[%s3 + $0x18] sm:$0xff]
  %v144 = vld [vmem:[%s3 + $0x20] sm:$0xff]
  %v145 = vld [vmem:[%s3 + $0x28] sm:$0xff]
  %v146 = vld [vmem:[%s3 + $0x30] sm:$0xff]
  %v147 = vld [vmem:[%s3 + $0x38] sm:$0xff]
  %v148 = vld [vmem:[%s3 + $0x40] sm:$0xff]
  %v149 = vld [vmem:[%s3 + $0x48] sm:$0xff]
  %v150 = vld [vmem:[%s3 + $0x50] sm:$0xff]
  %v151 = vld [vmem:[%s3 + $0x58] sm:$0xff]
  %v152 = vld [vmem:[%s3 + $0x60] sm:$0xff]
  %v153 = vld [vmem:[%s3 + $0x68] sm:$0xff]
  %v154 = vld [vmem:[%s3 + $0x70] sm:$0xff]
  %v155 = vld [vmem:[%s3 + $0x78] sm:$0xff]
  %v156 = vld [vmem:[%s4] sm:$0x1]
  %v158 = vlaneseq
  %v159 = vshrl.u32 %v158, 7
  %v160 = vsub.s32 0, %v159
  %v161 = vrot.slane %v156, %v160
  %vm171 = vcmask 1041409
  %v172 = vsel %vm171, %v133, %v132
  %vm173 = vcmask 1042434
  %v174 = vsel %vm173, %v134, %v172
  %vm175 = vcmask 1043459
  %v176 = vsel %vm175, %v135, %v174
  %vm177 = vcmask 1044484
  %v178 = vsel %vm177, %v136, %v176
  %vm179 = vcmask 1045509
  %v180 = vsel %vm179, %v137, %v178
  %vm181 = vcmask 1046534
  %v182 = vsel %vm181, %v138, %v180
  %vm183 = vcmask 1047559
  %v184 = vsel %vm183, %v139, %v182
  %186 = vmatprep.subr.mxu0 0.0
  %187 = vmatpush1.msra.mxu0 %v155
  %188 = vmatprep.subr.mxu0 0.0
  %189 = vmatpush1.msra.mxu0 %v154
  %190 = vmatprep.subr.mxu0 0.0
  %191 = vmatpush1.msra.mxu0 %v153
  %192 = vmatprep.subr.mxu0 0.0
  %193 = vmatpush1.msra.mxu0 %v152
  %194 = vmatprep.subr.mxu0 0.0
  %195 = vmatpush1.msra.mxu0 %v151
  %196 = vmatprep.subr.mxu0 0.0
  %197 = vmatpush1.msra.mxu0 %v150
  %198 = vmatprep.subr.mxu0 0.0
  %199 = vmatpush1.msra.mxu0 %v149
  %200 = vmatprep.subr.mxu0 0.0
  %201 = vmatpush1.msra.mxu0 %v148
  %202 = vmatprep.subr.mxu0 0.0
  %203 = vmatpush1.msra.mxu0 %v147
  %204 = vmatprep.subr.mxu0 0.0
  %205 = vmatpush1.msra.mxu0 %v146
  %206 = vmatprep.subr.mxu0 0.0
  %207 = vmatpush1.msra.mxu0 %v145
  %208 = vmatprep.subr.mxu0 0.0
  %209 = vmatpush1.msra.mxu0 %v144
  %210 = vmatprep.subr.mxu0 0.0
  %211 = vmatpush1.msra.mxu0 %v143
  %212 = vmatprep.subr.mxu0 0.0
  %213 = vmatpush1.msra.mxu0 %v142
  %214 = vmatprep.subr.mxu0 0.0
  %215 = vmatpush1.msra.mxu0 %v141
  %216 = vmatprep.subr.mxu0 0.0
  %217 = vmatpush1.msra.mxu0 %v140
  %218 = vmatprep.subr.mxu0 0.0
  %219 = vmatpush2.msra.mxu0 0.0
  %220 = vmatprep.subr.mxu0 0.0
  %221 = vmatpush2.msra.mxu0 0.0
  %222 = vmatprep.subr.mxu0 0.0
  %223 = vmatpush2.msra.mxu0 0.0
  %224 = vmatprep.subr.mxu0 0.0
  %225 = vmatpush2.msra.mxu0 0.0
  %226 = vmatprep.subr.mxu0 0.0
  %227 = vmatpush2.msra.mxu0 0.0
  %228 = vmatprep.subr.mxu0 0.0
  %229 = vmatpush2.msra.mxu0 0.0
  %230 = vmatprep.subr.mxu0 0.0
  %231 = vmatpush2.msra.mxu0 0.0
  %232 = vmatprep.subr.mxu0 0.0
  %233 = vmatpush2.msra.mxu0 0.0
  %234 = vmatprep.subr.mxu0 0.0
  %235 = vmatpush2.msra.mxu0 0.0
  %236 = vmatprep.subr.mxu0 0.0
  %237 = vmatpush2.msra.mxu0 0.0
  %238 = vmatprep.subr.mxu0 0.0
  %239 = vmatpush2.msra.mxu0 0.0
  %240 = vmatprep.subr.mxu0 0.0
  %241 = vmatpush2.msra.mxu0 0.0
  %242 = vmatprep.subr.mxu0 0.0
  %243 = vmatpush2.msra.mxu0 0.0
  %244 = vmatprep.subr.mxu0 0.0
  %245 = vmatpush2.msra.mxu0 0.0
  %246 = vmatprep.subr.mxu0 0.0
  %247 = vmatpush2.msra.mxu0 0.0
  %248 = vmatprep.subr.mxu0 0.0
  %249 = vmatpush2.msra.mxu0 0.0
  %250 = vmatprep.mubr.f32.mxu0 0.0
  %251 = vmatmul.mubr.f32.gmra.mxu0 %v184
  %v252 = vpop.f32.mrf.mxu0
  %v253 = vadd.f32 %v161, %v252
  %v254 = vpop.f32.mrf.mxu0
  %255 = vdwg.mxu0
  %256 = vst [vmem:[%s5] sm:$0xff] %v253
  // Predicated region
  $region22: #{cnn_forward.7} parent=0 // pred_check
    _
  $region23: #{cnn_forward.7} parent=0 // pred_check_branch
    %258 = sbr.rel (0) target = $region25
  $region24: #{cnn_forward.7} parent=0 // pred_region
    _
  $region25: #{cnn_forward.7} parent=0 // pred_fallthru
    _
  // Predicated region
  $region26: #{cnn_forward.7} parent=0 // pred_check
    _
  $region27: #{cnn_forward.7} parent=0 // pred_check_branch
    %260 = sbr.rel (0) target = $region29
  $region28: #{cnn_forward.7} parent=0 // pred_region
    _
  $region29: #{cnn_forward.7} parent=0 // pred_fallthru
    _

// kernel: cnn_forward.6
$region0: #{cnn_forward.6}
  #allocation0 [shape = 'u32[]', space=smem, size = 0x4, offset = 0x4, fixed_abs, tag = 'smem constant byte address 0x4 - core index']
  #allocation1 [shape = 'u32[144,128]{1,0:T(1,128)}', space=vmem, size = 0x12000, scoped, tag = 'internal scratch']
  %s0 = inlined_call_operand.vmem [shape: bf16[8,1024], index: 0, kind: input, shape index: {}]
  %s1 = inlined_call_operand.vmem [shape: f32[1,1024], index: 1, kind: input, shape index: {}]
  %s2 = inlined_call_operand.vmem [shape: f32[1,1024], index: 2, kind: input, shape index: {}]
  %s3 = inlined_call_operand.vmem [shape: bf16[1024,128], index: 3, kind: input, shape index: {}]
  %s4 = inlined_call_operand.vmem [shape: f32[1,128], index: 4, kind: input, shape index: {}]
  %s5 = inlined_call_operand.vmem [shape: bf16[8,128], index: 5, kind: output, shape index: {0}]
  %s6 = inlined_call_operand.vmem [shape: f32[1,1,128], index: 6, kind: output, shape index: {1}]
  %s7 = inlined_call_operand.vmem [shape: f32[1,1,128], index: 7, kind: output, shape index: {2}]
  %8 = xla_tuple %s5, %s6, %s7
  %s9 = sld [smem:[#allocation0]]
  $region46: #{cnn_forward.6} parent=0
    _
  %s11 = ssub.s32 1, %s9
  %s12 = scalar_select 0, %s11, %s9
  // Predicated region
  $region2: #{cnn_forward.6} parent=0 // pred_check
    _
  $region3: #{cnn_forward.6} parent=0 // pred_check_branch
    %14 = sbr.rel (0) target = $region5
  $region4: #{cnn_forward.6} parent=0 // pred_region
    _
  $region5: #{cnn_forward.6} parent=0 // pred_fallthru
    _
  // Predicated region
  $region6: #{cnn_forward.6} parent=0 // pred_check
    _
  $region7: #{cnn_forward.6} parent=0 // pred_check_branch
    %16 = sbr.rel (0) target = $region9
  $region8: #{cnn_forward.6} parent=0 // pred_region
    _
  $region9: #{cnn_forward.6} parent=0 // pred_fallthru
    _
  // Predicated region
  $region10: #{cnn_forward.6} parent=0 // pred_check
    _
  $region11: #{cnn_forward.6} parent=0 // pred_check_branch
    %18 = sbr.rel (0) target = $region13
  $region12: #{cnn_forward.6} parent=0 // pred_region
    _
  $region13: #{cnn_forward.6} parent=0 // pred_fallthru
    _
  // Predicated region
  $region14: #{cnn_forward.6} parent=0 // pred_check
    _
  $region15: #{cnn_forward.6} parent=0 // pred_check_branch
    %20 = sbr.rel (0) target = $region17
  $region16: #{cnn_forward.6} parent=0 // pred_region
    _
  $region17: #{cnn_forward.6} parent=0 // pred_fallthru
    _
  // Predicated region
  $region18: #{cnn_forward.6} parent=0 // pred_check
    _
  $region19: #{cnn_forward.6} parent=0 // pred_check_branch
    %22 = sbr.rel (0) target = $region21
  $region20: #{cnn_forward.6} parent=0 // pred_region
    _
  $region21: #{cnn_forward.6} parent=0 // pred_fallthru
    _
  %v24 = vld [vmem:[%s0] sm:$0xff]
  %v25 = vld [vmem:[%s0 + $0x8] sm:$0xff]
  %v26 = vld [vmem:[%s0 + $0x10] sm:$0xff]
  %v27 = vld [vmem:[%s0 + $0x18] sm:$0xff]
  %v28 = vunpack.c.l.bf16 %v24
  %v29 = vunpack.c.h.bf16 %v24
  %v30 = vunpack.c.l.bf16 %v25
  %v31 = vunpack.c.h.bf16 %v25
  %v32 = vunpack.c.l.bf16 %v26
  %v33 = vunpack.c.h.bf16 %v26
  %v34 = vunpack.c.l.bf16 %v27
  %v35 = vunpack.c.h.bf16 %v27
  %v36 = vld [vmem:[%s1] sm:$0xff]
  %v38 = vlaneseq
  %v39 = vshrl.u32 %v38, 7
  %v40 = vsub.s32 0, %v39
  %v41 = vrot.slane %v36, %v40
  %v42 = vlaneseq
  %v43 = vshrl.u32 %v42, 7
  %v44 = vsub.s32 1, %v43
  %v45 = vrot.slane %v36, %v44
  %v46 = vlaneseq
  %v47 = vshrl.u32 %v46, 7
  %v48 = vsub.s32 2, %v47
  %v49 = vrot.slane %v36, %v48
  %v50 = vlaneseq
  %v51 = vshrl.u32 %v50, 7
  %v52 = vsub.s32 3, %v51
  %v53 = vrot.slane %v36, %v52
  %v54 = vlaneseq
  %v55 = vshrl.u32 %v54, 7
  %v56 = vsub.s32 4, %v55
  %v57 = vrot.slane %v36, %v56
  %v58 = vlaneseq
  %v59 = vshrl.u32 %v58, 7
  %v60 = vsub.s32 5, %v59
  %v61 = vrot.slane %v36, %v60
  %v62 = vlaneseq
  %v63 = vshrl.u32 %v62, 7
  %v64 = vsub.s32 6, %v63
  %v65 = vrot.slane %v36, %v64
  %v66 = vlaneseq
  %v67 = vshrl.u32 %v66, 7
  %v68 = vsub.s32 7, %v67
  %v69 = vrot.slane %v36, %v68
  %v78 = vmul.f32 %v28, %v41
  %v79 = vmul.f32 %v29, %v45
  %v80 = vmul.f32 %v30, %v49
  %v81 = vmul.f32 %v31, %v53
  %v82 = vmul.f32 %v32, %v57
  %v83 = vmul.f32 %v33, %v61
  %v84 = vmul.f32 %v34, %v65
  %v85 = vmul.f32 %v35, %v69
  %v86 = vld [vmem:[%s2] sm:$0xff]
  %v88 = vlaneseq
  %v89 = vshrl.u32 %v88, 7
  %v90 = vsub.s32 0, %v89
  %v91 = vrot.slane %v86, %v90
  %v92 = vlaneseq
  %v93 = vshrl.u32 %v92, 7
  %v94 = vsub.s32 1, %v93
  %v95 = vrot.slane %v86, %v94
  %v96 = vlaneseq
  %v97 = vshrl.u32 %v96, 7
  %v98 = vsub.s32 2, %v97
  %v99 = vrot.slane %v86, %v98
  %v100 = vlaneseq
  %v101 = vshrl.u32 %v100, 7
  %v102 = vsub.s32 3, %v101
  %v103 = vrot.slane %v86, %v102
  %v104 = vlaneseq
  %v105 = vshrl.u32 %v104, 7
  %v106 = vsub.s32 4, %v105
  %v107 = vrot.slane %v86, %v106
  %v108 = vlaneseq
  %v109 = vshrl.u32 %v108, 7
  %v110 = vsub.s32 5, %v109
  %v111 = vrot.slane %v86, %v110
  %v112 = vlaneseq
  %v113 = vshrl.u32 %v112, 7
  %v114 = vsub.s32 6, %v113
  %v115 = vrot.slane %v86, %v114
  %v116 = vlaneseq
  %v117 = vshrl.u32 %v116, 7
  %v118 = vsub.s32 7, %v117
  %v119 = vrot.slane %v86, %v118
  %v128 = vadd.f32 %v78, %v91
  %v129 = vadd.f32 %v79, %v95
  %v130 = vadd.f32 %v80, %v99
  %v131 = vadd.f32 %v81, %v103
  %v132 = vadd.f32 %v82, %v107
  %v133 = vadd.f32 %v83, %v111
  %v134 = vadd.f32 %v84, %v115
  %v135 = vadd.f32 %v85, %v119
  %v136 = vmax.f32 %v128, 0.0
  %v137 = vmax.f32 %v129, 0.0
  %v138 = vmax.f32 %v130, 0.0
  %v139 = vmax.f32 %v131, 0.0
  %v140 = vmax.f32 %v132, 0.0
  %v141 = vmax.f32 %v133, 0.0
  %v142 = vmax.f32 %v134, 0.0
  %v143 = vmax.f32 %v135, 0.0
  %v144 = vpack.c.bf16 %v136, %v136
  %v145 = vpack.c.bf16 %v137, %v137
  %v146 = vpack.c.bf16 %v138, %v138
  %v147 = vpack.c.bf16 %v139, %v139
  %v148 = vpack.c.bf16 %v140, %v140
  %v149 = vpack.c.bf16 %v141, %v141
  %v150 = vpack.c.bf16 %v142, %v142
  %v151 = vpack.c.bf16 %v143, %v143
  %v152 = vld [vmem:[%s3] sm:$0xf]
  %v153 = vld [vmem:[%s3 + $0x4] sm:$0xf]
  %v154 = vld [vmem:[%s3 + $0x8] sm:$0xf]
  %v155 = vld [vmem:[%s3 + $0xc] sm:$0xf]
  %v156 = vld [vmem:[%s3 + $0x10] sm:$0xf]
  %v157 = vld [vmem:[%s3 + $0x14] sm:$0xf]
  %v158 = vld [vmem:[%s3 + $0x18] sm:$0xf]
  %v159 = vld [vmem:[%s3 + $0x1c] sm:$0xf]
  %v160 = vld [vmem:[%s3 + $0x20] sm:$0xf]
  %v161 = vld [vmem:[%s3 + $0x24] sm:$0xf]
  %v162 = vld [vmem:[%s3 + $0x28] sm:$0xf]
  %v163 = vld [vmem:[%s3 + $0x2c] sm:$0xf]
  %v164 = vld [vmem:[%s3 + $0x30] sm:$0xf]
  %v165 = vld [vmem:[%s3 + $0x34] sm:$0xf]
  %v166 = vld [vmem:[%s3 + $0x38] sm:$0xf]
  %v167 = vld [vmem:[%s3 + $0x3c] sm:$0xf]
  %v168 = vld [vmem:[%s3 + $0x40] sm:$0xf]
  %v169 = vld [vmem:[%s3 + $0x44] sm:$0xf]
  %v170 = vld [vmem:[%s3 + $0x48] sm:$0xf]
  %v171 = vld [vmem:[%s3 + $0x4c] sm:$0xf]
  %v172 = vld [vmem:[%s3 + $0x50] sm:$0xf]
  %v173 = vld [vmem:[%s3 + $0x54] sm:$0xf]
  %v174 = vld [vmem:[%s3 + $0x58] sm:$0xf]
  %v175 = vld [vmem:[%s3 + $0x5c] sm:$0xf]
  %v176 = vld [vmem:[%s3 + $0x60] sm:$0xf]
  %v177 = vld [vmem:[%s3 + $0x64] sm:$0xf]
  %v178 = vld [vmem:[%s3 + $0x68] sm:$0xf]
  %v179 = vld [vmem:[%s3 + $0x6c] sm:$0xf]
  %v180 = vld [vmem:[%s3 + $0x70] sm:$0xf]
  %v181 = vld [vmem:[%s3 + $0x74] sm:$0xf]
  %v182 = vld [vmem:[%s3 + $0x78] sm:$0xf]
  %v183 = vld [vmem:[%s3 + $0x7c] sm:$0xf]
  %v184 = vld [vmem:[%s3 + $0x80] sm:$0xf]
  %v185 = vld [vmem:[%s3 + $0x84] sm:$0xf]
  %v186 = vld [vmem:[%s3 + $0x88] sm:$0xf]
  %v187 = vld [vmem:[%s3 + $0x8c] sm:$0xf]
  %v188 = vld [vmem:[%s3 + $0x90] sm:$0xf]
  %v189 = vld [vmem:[%s3 + $0x94] sm:$0xf]
  %v190 = vld [vmem:[%s3 + $0x98] sm:$0xf]
  %v191 = vld [vmem:[%s3 + $0x9c] sm:$0xf]
  %v192 = vld [vmem:[%s3 + $0xa0] sm:$0xf]
  %v193 = vld [vmem:[%s3 + $0xa4] sm:$0xf]
  %v194 = vld [vmem:[%s3 + $0xa8] sm:$0xf]
  %v195 = vld [vmem:[%s3 + $0xac] sm:$0xf]
  %v196 = vld [vmem:[%s3 + $0xb0] sm:$0xf]
  %v197 = vld [vmem:[%s3 + $0xb4] sm:$0xf]
  %v198 = vld [vmem:[%s3 + $0xb8] sm:$0xf]
  %v199 = vld [vmem:[%s3 + $0xbc] sm:$0xf]
  %v200 = vld [vmem:[%s3 + $0xc0] sm:$0xf]
  %v201 = vld [vmem:[%s3 + $0xc4] sm:$0xf]
  %v202 = vld [vmem:[%s3 + $0xc8] sm:$0xf]
  %v203 = vld [vmem:[%s3 + $0xcc] sm:$0xf]
  %v204 = vld [vmem:[%s3 + $0xd0] sm:$0xf]
  %v205 = vld [vmem:[%s3 + $0xd4] sm:$0xf]
  %v206 = vld [vmem:[%s3 + $0xd8] sm:$0xf]
  %v207 = vld [vmem:[%s3 + $0xdc] sm:$0xf]
  %v208 = vld [vmem:[%s3 + $0xe0] sm:$0xf]
  %v209 = vld [vmem:[%s3 + $0xe4] sm:$0xf]
  %v210 = vld [vmem:[%s3 + $0xe8] sm:$0xf]
  %v211 = vld [vmem:[%s3 + $0xec] sm:$0xf]
  %v212 = vld [vmem:[%s3 + $0xf0] sm:$0xf]
  %v213 = vld [vmem:[%s3 + $0xf4] sm:$0xf]
  %v214 = vld [vmem:[%s3 + $0xf8] sm:$0xf]
  %v215 = vld [vmem:[%s3 + $0xfc] sm:$0xf]
  %v216 = vld [vmem:[%s3 + $0x100] sm:$0xf]
  %v217 = vld [vmem:[%s3 + $0x104] sm:$0xf]
  %v218 = vld [vmem:[%s3 + $0x108] sm:$0xf]
  %v219 = vld [vmem:[%s3 + $0x10c] sm:$0xf]
  %v220 = vld [vmem:[%s3 + $0x110] sm:$0xf]
  %v221 = vld [vmem:[%s3 + $0x114] sm:$0xf]
  %v222 = vld [vmem:[%s3 + $0x118] sm:$0xf]
  %v223 = vld [vmem:[%s3 + $0x11c] sm:$0xf]
  %v224 = vld [vmem:[%s3 + $0x120] sm:$0xf]
  %v225 = vld [vmem:[%s3 + $0x124] sm:$0xf]
  %v226 = vld [vmem:[%s3 + $0x128] sm:$0xf]
  %v227 = vld [vmem:[%s3 + $0x12c] sm:$0xf]
  %v228 = vld [vmem:[%s3 + $0x130] sm:$0xf]
  %v229 = vld [vmem:[%s3 + $0x134] sm:$0xf]
  %v230 = vld [vmem:[%s3 + $0x138] sm:$0xf]
  %v231 = vld [vmem:[%s3 + $0x13c] sm:$0xf]
  %v232 = vld [vmem:[%s3 + $0x140] sm:$0xf]
  %v233 = vld [vmem:[%s3 + $0x144] sm:$0xf]
  %v234 = vld [vmem:[%s3 + $0x148] sm:$0xf]
  %v235 = vld [vmem:[%s3 + $0x14c] sm:$0xf]
  %v236 = vld [vmem:[%s3 + $0x150] sm:$0xf]
  %v237 = vld [vmem:[%s3 + $0x154] sm:$0xf]
  %v238 = vld [vmem:[%s3 + $0x158] sm:$0xf]
  %v239 = vld [vmem:[%s3 + $0x15c] sm:$0xf]
  %v240 = vld [vmem:[%s3 + $0x160] sm:$0xf]
  %v241 = vld [vmem:[%s3 + $0x164] sm:$0xf]
  %v242 = vld [vmem:[%s3 + $0x168] sm:$0xf]
  %v243 = vld [vmem:[%s3 + $0x16c] sm:$0xf]
  %v244 = vld [vmem:[%s3 + $0x170] sm:$0xf]
  %v245 = vld [vmem:[%s3 + $0x174] sm:$0xf]
  %v246 = vld [vmem:[%s3 + $0x178] sm:$0xf]
  %v247 = vld [vmem:[%s3 + $0x17c] sm:$0xf]
  %v248 = vld [vmem:[%s3 + $0x180] sm:$0xf]
  %v249 = vld [vmem:[%s3 + $0x184] sm:$0xf]
  %v250 = vld [vmem:[%s3 + $0x188] sm:$0xf]
  %v251 = vld [vmem:[%s3 + $0x18c] sm:$0xf]
  %v252 = vld [vmem:[%s3 + $0x190] sm:$0xf]
  %v253 = vld [vmem:[%s3 + $0x194] sm:$0xf]
  %v254 = vld [vmem:[%s3 + $0x198] sm:$0xf]
  %v255 = vld [vmem:[%s3 + $0x19c] sm:$0xf]
  %v256 = vld [vmem:[%s3 + $0x1a0] sm:$0xf]
  %v257 = vld [vmem:[%s3 + $0x1a4] sm:$0xf]
  %v258 = vld [vmem:[%s3 + $0x1a8] sm:$0xf]
  %v259 = vld [vmem:[%s3 + $0x1ac] sm:$0xf]
  %v260 = vld [vmem:[%s3 + $0x1b0] sm:$0xf]
  %v261 = vld [vmem:[%s3 + $0x1b4] sm:$0xf]
  %v262 = vld [vmem:[%s3 + $0x1b8] sm:$0xf]
  %v263 = vld [vmem:[%s3 + $0x1bc] sm:$0xf]
  %v264 = vld [vmem:[%s3 + $0x1c0] sm:$0xf]
  %v265 = vld [vmem:[%s3 + $0x1c4] sm:$0xf]
  %v266 = vld [vmem:[%s3 + $0x1c8] sm:$0xf]
  %v267 = vld [vmem:[%s3 + $0x1cc] sm:$0xf]
  %v268 = vld [vmem:[%s3 + $0x1d0] sm:$0xf]
  %v269 = vld [vmem:[%s3 + $0x1d4] sm:$0xf]
  %v270 = vld [vmem:[%s3 + $0x1d8] sm:$0xf]
  %v271 = vld [vmem:[%s3 + $0x1dc] sm:$0xf]
  %v272 = vld [vmem:[%s3 + $0x1e0] sm:$0xf]
  %v273 = vld [vmem:[%s3 + $0x1e4] sm:$0xf]
  %v274 = vld [vmem:[%s3 + $0x1e8] sm:$0xf]
  %v275 = vld [vmem:[%s3 + $0x1ec] sm:$0xf]
  %v276 = vld [vmem:[%s3 + $0x1f0] sm:$0xf]
  %v277 = vld [vmem:[%s3 + $0x1f4] sm:$0xf]
  %v278 = vld [vmem:[%s3 + $0x1f8] sm:$0xf]
  %v279 = vld [vmem:[%s3 + $0x1fc] sm:$0xf]
  %v280 = vld [vmem:[%s4] sm:$0x1]
  %v282 = vlaneseq
  %v283 = vshrl.u32 %v282, 7
  %v284 = vsub.s32 0, %v283
  %v285 = vrot.slane %v280, %v284
  %v415 = vunpack.c.l.b16 %v152
  %v416 = vunpack.c.l.b16 %v153
  %v417 = vunpack.c.l.b16 %v154
  %v418 = vunpack.c.l.b16 %v155
  %v419 = vunpack.c.l.b16 %v156
  %v420 = vunpack.c.l.b16 %v157
  %v421 = vunpack.c.l.b16 %v158
  %v422 = vunpack.c.l.b16 %v159
  %v423 = vunpack.c.l.b16 %v160
  %v424 = vunpack.c.l.b16 %v161
  %v425 = vunpack.c.l.b16 %v162
  %v426 = vunpack.c.l.b16 %v163
  %v427 = vunpack.c.l.b16 %v164
  %v428 = vunpack.c.l.b16 %v165
  %v429 = vunpack.c.l.b16 %v166
  %v430 = vunpack.c.l.b16 %v167
  %v431 = vunpack.c.l.b16 %v168
  %v432 = vunpack.c.l.b16 %v169
  %v433 = vunpack.c.l.b16 %v170
  %v434 = vunpack.c.l.b16 %v171
  %v435 = vunpack.c.l.b16 %v172
  %v436 = vunpack.c.l.b16 %v173
  %v437 = vunpack.c.l.b16 %v174
  %v438 = vunpack.c.l.b16 %v175
  %v439 = vunpack.c.l.b16 %v176
  %v440 = vunpack.c.l.b16 %v177
  %v441 = vunpack.c.l.b16 %v178
  %v442 = vunpack.c.l.b16 %v179
  %v443 = vunpack.c.l.b16 %v180
  %v444 = vunpack.c.l.b16 %v181
  %v445 = vunpack.c.l.b16 %v182
  %v446 = vunpack.c.l.b16 %v183
  %v447 = vunpack.c.l.b16 %v184
  %v448 = vunpack.c.l.b16 %v185
  %v449 = vunpack.c.l.b16 %v186
  %v450 = vunpack.c.l.b16 %v187
  %v451 = vunpack.c.l.b16 %v188
  %v452 = vunpack.c.l.b16 %v189
  %v453 = vunpack.c.l.b16 %v190
  %v454 = vunpack.c.l.b16 %v191
  %v455 = vunpack.c.l.b16 %v192
  %v456 = vunpack.c.l.b16 %v193
  %v457 = vunpack.c.l.b16 %v194
  %v458 = vunpack.c.l.b16 %v195
  %v459 = vunpack.c.l.b16 %v196
  %v460 = vunpack.c.l.b16 %v197
  %v461 = vunpack.c.l.b16 %v198
  %v462 = vunpack.c.l.b16 %v199
  %v463 = vunpack.c.l.b16 %v200
  %v464 = vunpack.c.l.b16 %v201
  %v465 = vunpack.c.l.b16 %v202
  %v466 = vunpack.c.l.b16 %v203
  %v467 = vunpack.c.l.b16 %v204
  %v468 = vunpack.c.l.b16 %v205
  %v469 = vunpack.c.l.b16 %v206
  %v470 = vunpack.c.l.b16 %v207
  %v471 = vunpack.c.l.b16 %v208
  %v472 = vunpack.c.l.b16 %v209
  %v473 = vunpack.c.l.b16 %v210
  %v474 = vunpack.c.l.b16 %v211
  %v475 = vunpack.c.l.b16 %v212
  %v476 = vunpack.c.l.b16 %v213
  %v477 = vunpack.c.l.b16 %v214
  %v478 = vunpack.c.l.b16 %v215
  %v479 = vunpack.c.l.b16 %v216
  %v480 = vunpack.c.l.b16 %v217
  %v481 = vunpack.c.l.b16 %v218
  %v482 = vunpack.c.l.b16 %v219
  %v483 = vunpack.c.l.b16 %v220
  %v484 = vunpack.c.l.b16 %v221
  %v485 = vunpack.c.l.b16 %v222
  %v486 = vunpack.c.l.b16 %v223
  %v487 = vunpack.c.l.b16 %v224
  %v488 = vunpack.c.l.b16 %v225
  %v489 = vunpack.c.l.b16 %v226
  %v490 = vunpack.c.l.b16 %v227
  %v491 = vunpack.c.l.b16 %v228
  %v492 = vunpack.c.l.b16 %v229
  %v493 = vunpack.c.l.b16 %v230
  %v494 = vunpack.c.l.b16 %v231
  %v495 = vunpack.c.l.b16 %v232
  %v496 = vunpack.c.l.b16 %v233
  %v497 = vunpack.c.l.b16 %v234
  %v498 = vunpack.c.l.b16 %v235
  %v499 = vunpack.c.l.b16 %v236
  %v500 = vunpack.c.l.b16 %v237
  %v501 = vunpack.c.l.b16 %v238
  %v502 = vunpack.c.l.b16 %v239
  %v503 = vunpack.c.l.b16 %v240
  %v504 = vunpack.c.l.b16 %v241
  %v505 = vunpack.c.l.b16 %v242
  %v506 = vunpack.c.l.b16 %v243
  %v507 = vunpack.c.l.b16 %v244
  %v508 = vunpack.c.l.b16 %v245
  %v509 = vunpack.c.l.b16 %v246
  %v510 = vunpack.c.l.b16 %v247
  %v511 = vunpack.c.l.b16 %v248
  %v512 = vunpack.c.l.b16 %v249
  %v513 = vunpack.c.l.b16 %v250
  %v514 = vunpack.c.l.b16 %v251
  %v515 = vunpack.c.l.b16 %v252
  %v516 = vunpack.c.l.b16 %v253
  %v517 = vunpack.c.l.b16 %v254
  %v518 = vunpack.c.l.b16 %v255
  %v519 = vunpack.c.l.b16 %v256
  %v520 = vunpack.c.l.b16 %v257
  %v521 = vunpack.c.l.b16 %v258
  %v522 = vunpack.c.l.b16 %v259
  %v523 = vunpack.c.l.b16 %v260
  %v524 = vunpack.c.l.b16 %v261
  %v525 = vunpack.c.l.b16 %v262
  %v526 = vunpack.c.l.b16 %v263
  %v527 = vunpack.c.l.b16 %v264
  %v528 = vunpack.c.l.b16 %v265
  %v529 = vunpack.c.l.b16 %v266
  %v530 = vunpack.c.l.b16 %v267
  %v531 = vunpack.c.l.b16 %v268
  %v532 = vunpack.c.l.b16 %v269
  %v533 = vunpack.c.l.b16 %v270
  %v534 = vunpack.c.l.b16 %v271
  %v535 = vunpack.c.l.b16 %v272
  %v536 = vunpack.c.l.b16 %v273
  %v537 = vunpack.c.l.b16 %v274
  %v538 = vunpack.c.l.b16 %v275
  %v539 = vunpack.c.l.b16 %v276
  %v540 = vunpack.c.l.b16 %v277
  %v541 = vunpack.c.l.b16 %v278
  %v542 = vunpack.c.l.b16 %v279
  %v543 = vpack.c.b16 %v416, %v415
  %v544 = vpack.c.b16 %v418, %v417
  %v545 = vpack.c.b16 %v420, %v419
  %v546 = vpack.c.b16 %v422, %v421
  %v547 = vpack.c.b16 %v424, %v423
  %v548 = vpack.c.b16 %v426, %v425
  %v549 = vpack.c.b16 %v428, %v427
  %v550 = vpack.c.b16 %v430, %v429
  %v551 = vpack.c.b16 %v432, %v431
  %v552 = vpack.c.b16 %v434, %v433
  %v553 = vpack.c.b16 %v436, %v435
  %v554 = vpack.c.b16 %v438, %v437
  %v555 = vpack.c.b16 %v440, %v439
  %v556 = vpack.c.b16 %v442, %v441
  %v557 = vpack.c.b16 %v444, %v443
  %v558 = vpack.c.b16 %v446, %v445
  %v559 = vpack.c.b16 %v448, %v447
  %v560 = vpack.c.b16 %v450, %v449
  %v561 = vpack.c.b16 %v452, %v451
  %v562 = vpack.c.b16 %v454, %v453
  %v563 = vpack.c.b16 %v456, %v455
  %v564 = vpack.c.b16 %v458, %v457
  %v565 = vpack.c.b16 %v460, %v459
  %v566 = vpack.c.b16 %v462, %v461
  %v567 = vpack.c.b16 %v464, %v463
  %v568 = vpack.c.b16 %v466, %v465
  %v569 = vpack.c.b16 %v468, %v467
  %v570 = vpack.c.b16 %v470, %v469
  %v571 = vpack.c.b16 %v472, %v471
  %v572 = vpack.c.b16 %v474, %v473
  %v573 = vpack.c.b16 %v476, %v475
  %v574 = vpack.c.b16 %v478, %v477
  %v575 = vpack.c.b16 %v480, %v479
  %v576 = vpack.c.b16 %v482, %v481
  %v577 = vpack.c.b16 %v484, %v483
  %v578 = vpack.c.b16 %v486, %v485
  %v579 = vpack.c.b16 %v488, %v487
  %v580 = vpack.c.b16 %v490, %v489
  %v581 = vpack.c.b16 %v492, %v491
  %v582 = vpack.c.b16 %v494, %v493
  %v583 = vpack.c.b16 %v496, %v495
  %v584 = vpack.c.b16 %v498, %v497
  %v585 = vpack.c.b16 %v500, %v499
  %v586 = vpack.c.b16 %v502, %v501
  %v587 = vpack.c.b16 %v504, %v503
  %v588 = vpack.c.b16 %v506, %v505
  %v589 = vpack.c.b16 %v508, %v507
  %v590 = vpack.c.b16 %v510, %v509
  %v591 = vpack.c.b16 %v512, %v511
  %v592 = vpack.c.b16 %v514, %v513
  %v593 = vpack.c.b16 %v516, %v515
  %v594 = vpack.c.b16 %v518, %v517
  %v595 = vpack.c.b16 %v520, %v519
  %v596 = vpack.c.b16 %v522, %v521
  %v597 = vpack.c.b16 %v524, %v523
  %v598 = vpack.c.b16 %v526, %v525
  %v599 = vpack.c.b16 %v528, %v527
  %v600 = vpack.c.b16 %v530, %v529
  %v601 = vpack.c.b16 %v532, %v531
  %v602 = vpack.c.b16 %v534, %v533
  %v603 = vpack.c.b16 %v536, %v535
  %v604 = vpack.c.b16 %v538, %v537
  %v605 = vpack.c.b16 %v540, %v539
  %v606 = vpack.c.b16 %v542, %v541
  %671 = vmatprep.subr.bf16.mxu0 0
  %672 = vmatpush1.bf16.msra.mxu0 %v550
  %673 = vmatprep.subr.bf16.mxu0 0
  %674 = vmatpush1.bf16.msra.mxu0 %v549
  %675 = vmatprep.subr.bf16.mxu0 0
  %676 = vmatpush1.bf16.msra.mxu0 %v548
  %677 = vmatprep.subr.bf16.mxu0 0
  %678 = vmatpush1.bf16.msra.mxu0 %v547
  %679 = vmatprep.subr.bf16.mxu0 0
  %680 = vmatpush1.bf16.msra.mxu0 %v546
  %681 = vmatprep.subr.bf16.mxu0 0
  %682 = vmatpush1.bf16.msra.mxu0 %v545
  %683 = vmatprep.subr.bf16.mxu0 0
  %684 = vmatpush1.bf16.msra.mxu0 %v544
  %685 = vmatprep.subr.bf16.mxu0 0
  %686 = vmatpush1.bf16.msra.mxu0 %v543
  %687 = vmatprep.subr.bf16.mxu0 0
  %688 = vmatpush2.bf16.msra.mxu0 %v558
  %689 = vmatprep.subr.bf16.mxu0 0
  %690 = vmatpush2.bf16.msra.mxu0 %v557
  %691 = vmatprep.subr.bf16.mxu0 0
  %692 = vmatpush2.bf16.msra.mxu0 %v556
  %693 = vmatprep.subr.bf16.mxu0 0
  %694 = vmatpush2.bf16.msra.mxu0 %v555
  %695 = vmatprep.subr.bf16.mxu0 0
  %696 = vmatpush2.bf16.msra.mxu0 %v554
  %697 = vmatprep.subr.bf16.mxu0 0
  %698 = vmatpush2.bf16.msra.mxu0 %v553
  %699 = vmatprep.subr.bf16.mxu0 0
  %700 = vmatpush2.bf16.msra.mxu0 %v552
  %701 = vmatprep.subr.bf16.mxu0 0
  %702 = vmatpush2.bf16.msra.mxu0 %v551
  %703 = vmatprep.mubr.bf16.mxu0 %v145
  %704 = vmatmul.mubr.bf16.gmra.mxu0 %v144
  %v705 = vpop.f32.mrf.mxu0
  %v706 = vadd.f32 %v285, %v705
  %v707 = vpop.f32.mrf.mxu0
  %v708 = vpop.f32.mrf.mxu0
  %v709 = vpop.f32.mrf.mxu0
  %710 = vdwg.mxu0
  %711 = vmatprep.subr.bf16.mxu0 0
  %712 = vmatpush1.bf16.msra.mxu0 %v566
  %713 = vmatprep.subr.bf16.mxu0 0
  %714 = vmatpush1.bf16.msra.mxu0 %v565
  %715 = vmatprep.subr.bf16.mxu0 0
  %716 = vmatpush1.bf16.msra.mxu0 %v564
  %717 = vmatprep.subr.bf16.mxu0 0
  %718 = vmatpush1.bf16.msra.mxu0 %v563
  %719 = vmatprep.subr.bf16.mxu0 0
  %720 = vmatpush1.bf16.msra.mxu0 %v562
  %721 = vmatprep.subr.bf16.mxu0 0
  %722 = vmatpush1.bf16.msra.mxu0 %v561
  %723 = vmatprep.subr.bf16.mxu0 0
  %724 = vmatpush1.bf16.msra.mxu0 %v560
  %725 = vmatprep.subr.bf16.mxu0 0
  %726 = vmatpush1.bf16.msra.mxu0 %v559
  %727 = vmatprep.subr.bf16.mxu0 0
  %728 = vmatpush2.bf16.msra.mxu0 %v574
  %729 = vmatprep.subr.bf16.mxu0 0
  %730 = vmatpush2.bf16.msra.mxu0 %v573
  %731 = vmatprep.subr.bf16.mxu0 0
  %732 = vmatpush2.bf16.msra.mxu0 %v572
  %733 = vmatprep.subr.bf16.mxu0 0
  %734 = vmatpush2.bf16.msra.mxu0 %v571
  %735 = vmatprep.subr.bf16.mxu0 0
  %736 = vmatpush2.bf16.msra.mxu0 %v570
  %737 = vmatprep.subr.bf16.mxu0 0
  %738 = vmatpush2.bf16.msra.mxu0 %v569
  %739 = vmatprep.subr.bf16.mxu0 0
  %740 = vmatpush2.bf16.msra.mxu0 %v568
  %741 = vmatprep.subr.bf16.mxu0 0
  %742 = vmatpush2.bf16.msra.mxu0 %v567
  %743 = vmatprep.mubr.bf16.mxu0 %v147
  %744 = vmatmul.mubr.bf16.gmra.mxu0 %v146
  %v745 = vpop.f32.mrf.mxu0
  %v746 = vadd.f32 %v706, %v745
  %v747 = vpop.f32.mrf.mxu0
  %v748 = vpop.f32.mrf.mxu0
  %v749 = vpop.f32.mrf.mxu0
  %750 = vdwg.mxu0
  %751 = vmatprep.subr.bf16.mxu0 0
  %752 = vmatpush1.bf16.msra.mxu0 %v582
  %753 = vmatprep.subr.bf16.mxu0 0
  %754 = vmatpush1.bf16.msra.mxu0 %v581
  %755 = vmatprep.subr.bf16.mxu0 0
  %756 = vmatpush1.bf16.msra.mxu0 %v580
  %757 = vmatprep.subr.bf16.mxu0 0
  %758 = vmatpush1.bf16.msra.mxu0 %v579
  %759 = vmatprep.subr.bf16.mxu0 0
  %760 = vmatpush1.bf16.msra.mxu0 %v578
  %761 = vmatprep.subr.bf16.mxu0 0
  %762 = vmatpush1.bf16.msra.mxu0 %v577
  %763 = vmatprep.subr.bf16.mxu0 0
  %764 = vmatpush1.bf16.msra.mxu0 %v576
  %765 = vmatprep.subr.bf16.mxu0 0
  %766 = vmatpush1.bf16.msra.mxu0 %v575
  %767 = vmatprep.subr.bf16.mxu0 0
  %768 = vmatpush2.bf16.msra.mxu0 %v590
  %769 = vmatprep.subr.bf16.mxu0 0
  %770 = vmatpush2.bf16.msra.mxu0 %v589
  %771 = vmatprep.subr.bf16.mxu0 0
  %772 = vmatpush2.bf16.msra.mxu0 %v588
  %773 = vmatprep.subr.bf16.mxu0 0
  %774 = vmatpush2.bf16.msra.mxu0 %v587
  %775 = vmatprep.subr.bf16.mxu0 0
  %776 = vmatpush2.bf16.msra.mxu0 %v586
  %777 = vmatprep.subr.bf16.mxu0 0
  %778 = vmatpush2.bf16.msra.mxu0 %v585
  %779 = vmatprep.subr.bf16.mxu0 0
  %780 = vmatpush2.bf16.msra.mxu0 %v584
  %781 = vmatprep.subr.bf16.mxu0 0
  %782 = vmatpush2.bf16.msra.mxu0 %v583
  %783 = vmatprep.mubr.bf16.mxu0 %v149
  %784 = vmatmul.mubr.bf16.gmra.mxu0 %v148
  %v785 = vpop.f32.mrf.mxu0
  %v786 = vadd.f32 %v746, %v785
  %v787 = vpop.f32.mrf.mxu0
  %v788 = vpop.f32.mrf.mxu0
  %v789 = vpop.f32.mrf.mxu0
  %790 = vdwg.mxu0
  %791 = vmatprep.subr.bf16.mxu0 0
  %792 = vmatpush1.bf16.msra.mxu0 %v598
  %793 = vmatprep.subr.bf16.mxu0 0
  %794 = vmatpush1.bf16.msra.mxu0 %v597
  %795 = vmatprep.subr.bf16.mxu0 0
  %796 = vmatpush1.bf16.msra.mxu0 %v596
  %797 = vmatprep.subr.bf16.mxu0 0
  %798 = vmatpush1.bf16.msra.mxu0 %v595
  %799 = vmatprep.subr.bf16.mxu0 0
  %800 = vmatpush1.bf16.msra.mxu0 %v594
  %801 = vmatprep.subr.bf16.mxu0 0
  %802 = vmatpush1.bf16.msra.mxu0 %v593
  %803 = vmatprep.subr.bf16.mxu0 0
  %804 = vmatpush1.bf16.msra.mxu0 %v592
  %805 = vmatprep.subr.bf16.mxu0 0
  %806 = vmatpush1.bf16.msra.mxu0 %v591
  %807 = vmatprep.subr.bf16.mxu0 0
  %808 = vmatpush2.bf16.msra.mxu0 %v606
  %809 = vmatprep.subr.bf16.mxu0 0
  %810 = vmatpush2.bf16.msra.mxu0 %v605
  %811 = vmatprep.subr.bf16.mxu0 0
  %812 = vmatpush2.bf16.msra.mxu0 %v604
  %813 = vmatprep.subr.bf16.mxu0 0
  %814 = vmatpush2.bf16.msra.mxu0 %v603
  %815 = vmatprep.subr.bf16.mxu0 0
  %816 = vmatpush2.bf16.msra.mxu0 %v602
  %817 = vmatprep.subr.bf16.mxu0 0
  %818 = vmatpush2.bf16.msra.mxu0 %v601
  %819 = vmatprep.subr.bf16.mxu0 0
  %820 = vmatpush2.bf16.msra.mxu0 %v600
  %821 = vmatprep.subr.bf16.mxu0 0
  %822 = vmatpush2.bf16.msra.mxu0 %v599
  %823 = vmatprep.mubr.bf16.mxu0 %v151
  %824 = vmatmul.mubr.bf16.gmra.mxu0 %v150
  %v825 = vpop.f32.mrf.mxu0
  %v826 = vadd.f32 %v786, %v825
  %v827 = vpop.f32.mrf.mxu0
  %v828 = vpop.f32.mrf.mxu0
  %v829 = vpop.f32.mrf.mxu0
  %830 = vdwg.mxu0
  %v831 = vpack.c.bf16 %v826, %v826
  %832 = vst [vmem:[%s5] sm:$0xf] %v831
  %v833 = vrot.slane %v826, 4
  %v834 = vadd.f32 %v826, %v833
  %v835 = vrot.slane %v834, 2
  %v836 = vadd.f32 %v834, %v835
  %v837 = vrot.slane %v836, 1
  %v838 = vadd.f32 %v836, %v837
  %v839 = vmul.f32 %v838, 0.125
  %v840 = vsub.f32 %v826, %v839
  %841 = vst [vmem:[%s6] sm:$0x1] %v838
  %v842 = vmul.f32 %v840, %v840
  %v843 = vrot.slane %v842, 4
  %v844 = vadd.f32 %v842, %v843
  %v845 = vrot.slane %v844, 2
  %v846 = vadd.f32 %v844, %v845
  %v847 = vrot.slane %v846, 1
  %v848 = vadd.f32 %v846, %v847
  %849 = vst [vmem:[%s7] sm:$0x1] %v848
  // Predicated region
  $region22: #{cnn_forward.6} parent=0 // pred_check
    _
  $region23: #{cnn_forward.6} parent=0 // pred_check_branch
    %851 = sbr.rel (0) target = $region25
  $region24: #{cnn_forward.6} parent=0 // pred_region
    _
  $region25: #{cnn_forward.6} parent=0 // pred_fallthru
    _
  // Predicated region
  $region26: #{cnn_forward.6} parent=0 // pred_check
    _
  $region27: #{cnn_forward.6} parent=0 // pred_check_branch
    %853 = sbr.rel (0) target = $region29
  $region28: #{cnn_forward.6} parent=0 // pred_region
    _
  $region29: #{cnn_forward.6} parent=0 // pred_fallthru
    _
  // Predicated region
  $region30: #{cnn_forward.6} parent=0 // pred_check
    _
  $region31: #{cnn_forward.6} parent=0 // pred_check_branch
    %855 = sbr.rel (0) target = $region33
  $region32: #{cnn_forward.6} parent=0 // pred_region
    _
  $region33: #{cnn_forward.6} parent=0 // pred_fallthru
    _
  // Predicated region
  $region34: #{cnn_forward.6} parent=0 // pred_check
    _
  $region35: #{cnn_forward.6} parent=0 // pred_check_branch
    %857 = sbr.rel (0) target = $region37
  $region36: #{cnn_forward.6} parent=0 // pred_region
    _
  $region37: #{cnn_forward.6} parent=0 // pred_fallthru
    _
  // Predicated region
  $region38: #{cnn_forward.6} parent=0 // pred_check
    _
  $region39: #{cnn_forward.6} parent=0 // pred_check_branch
    %859 = sbr.rel (0) target = $region41
  $region40: #{cnn_forward.6} parent=0 // pred_region
    _
  $region41: #{cnn_forward.6} parent=0 // pred_fallthru
    _
  // Predicated region
  $region42: #{cnn_forward.6} parent=0 // pred_check
    _
  $region43: #{cnn_forward.6} parent=0 // pred_check_branch
    %861 = sbr.rel (0) target = $region45
  $region44: #{cnn_forward.6} parent=0 // pred_region
    _
  $region45: #{cnn_forward.6} parent=0 // pred_fallthru
    _

</llo_original>
